<compile_context>
chip_gen: v7x
topology: tpu7x:2x2x1
jax: 0.10.0
libtpu: 0.0.40
codegen_flags: <defaults>
</compile_context>

<pallas_src>
import jax
import jax.numpy as jnp
from jax.experimental import pallas as pl
from jax.experimental.pallas import tpu as pltpu

K_IN = 28 * 28      # 784
K_PAD = 896         # 784 padded to a multiple of 128 (lane width)
H = 512
N_OUT = 10
N_PAD = 128         # 10 padded to the lane width


def mlp_kernel(x_ref, w1_ref, b1_ref, w2_ref, b2_ref, w3_ref, b3_ref, out_ref):
    # Layer 1: (TM, 896) bf16 @ (896, 512) bf16 -> f32 acc, + bias, ReLU
    h1 = jnp.dot(x_ref[...], w1_ref[...], preferred_element_type=jnp.float32)
    h1 = jnp.maximum(h1 + b1_ref[...], 0.0)
    # Layer 2: (TM, 512) @ (512, 512)
    h2 = jnp.dot(h1.astype(jnp.bfloat16), w2_ref[...],
                 preferred_element_type=jnp.float32)
    h2 = jnp.maximum(h2 + b2_ref[...], 0.0)
    # Layer 3: (TM, 512) @ (512, 128)  (N padded to 128 -> unmasked lane-dense store)
    h3 = jnp.dot(h2.astype(jnp.bfloat16), w3_ref[...],
                 preferred_element_type=jnp.float32)
    out_ref[...] = jnp.maximum(h3 + b3_ref[...], 0.0)


def _round_up(n, m):
    return -(-n // m) * m


def neural_network_forward(x_nchw, params, *, tm=256):
    """x_nchw: (B, 1, 28, 28) float32. Returns (B, 10) float32."""
    w1, b1, w2, b2, w3, b3 = params
    B = x_nchw.shape[0]

    # nn.Flatten(): flatten everything except batch dim (row-major, like PyTorch).
    x_flat = x_nchw.reshape(B, -1).astype(jnp.bfloat16)          # (B, 784)

    # Batch tile: round B up to a bf16 sublane multiple (16), cap at tm.
    TM = min(tm, _round_up(B, 16))
    Bp = _round_up(B, TM)

    # Zero-pad: batch -> Bp, K 784 -> 896, final N 10 -> 128.
    x_p = jnp.zeros((Bp, K_PAD), jnp.bfloat16).at[:B, :K_IN].set(x_flat)
    w1_p = jnp.zeros((K_PAD, H), jnp.bfloat16).at[:K_IN, :].set(w1.astype(jnp.bfloat16))
    w2_b = w2.astype(jnp.bfloat16)
    w3_p = jnp.zeros((H, N_PAD), jnp.bfloat16).at[:, :N_OUT].set(w3.astype(jnp.bfloat16))
    b3_p = jnp.zeros((1, N_PAD), jnp.float32).at[:, :N_OUT].set(b3)

    resident = lambda i: (0, 0)   # weights/biases stay in VMEM across grid steps

    out = pl.pallas_call(
        mlp_kernel,
        out_shape=jax.ShapeDtypeStruct((Bp, N_PAD), jnp.float32),
        grid=(Bp // TM,),
        in_specs=[
            pl.BlockSpec((TM, K_PAD), lambda i: (i, 0)),   # x tile
            pl.BlockSpec((K_PAD, H), resident),            # w1
            pl.BlockSpec((1, H), resident),                # b1
            pl.BlockSpec((H, H), resident),                # w2
            pl.BlockSpec((1, H), resident),                # b2
            pl.BlockSpec((H, N_PAD), resident),            # w3 (padded)
            pl.BlockSpec((1, N_PAD), resident),            # b3 (padded)
        ],
        out_specs=pl.BlockSpec((TM, N_PAD), lambda i: (i, 0)),
        compiler_params=pltpu.CompilerParams(
            dimension_semantics=("parallel",),
            vmem_limit_bytes=16 << 20,
        ),
    )(x_p, w1_p, b1, w2_b, b2, w3_p, b3_p)

    return out[:B, :N_OUT]


def init_params(key):
    """Deterministic init mimicking PyTorch nn.Linear default (uniform +-1/sqrt(fan_in)).
    Weights stored as (in_features, out_features)."""
    def linear_init(k, fan_in, fan_out):
        kw, kb = jax.random.split(k)
        bound = 1.0 / jnp.sqrt(fan_in)
        w = jax.random.uniform(kw, (fan_in, fan_out), jnp.float32, -bound, bound)
        b = jax.random.uniform(kb, (1, fan_out), jnp.float32, -bound, bound)
        return w, b

    k1, k2, k3 = jax.random.split(key, 3)
    w1, b1 = linear_init(k1, K_IN, H)
    w2, b2 = linear_init(k2, H, H)
    w3, b3 = linear_init(k3, H, N_OUT)
    return (w1, b1, w2, b2, w3, b3)


if __name__ == "__main__":
    key = jax.random.PRNGKey(0)
    k_params, k_x = jax.random.split(key)

    params = init_params(k_params)
    # Small batch of MNIST-shaped inputs: (B, C, H, W) = (8, 1, 28, 28)
    x = jax.random.uniform(k_x, (8, 1, 28, 28), jnp.float32)

    logits = neural_network_forward(x, params)
    jax.block_until_ready(logits)

    # Reference in plain JAX with the same bf16-weight / f32-accumulate recipe.
    w1, b1, w2, b2, w3, b3 = params
    xf = x.reshape(x.shape[0], -1).astype(jnp.bfloat16)
    ref = jnp.maximum(
        jnp.dot(xf, w1.astype(jnp.bfloat16), preferred_element_type=jnp.float32) + b1, 0.0)
    ref = jnp.maximum(
        jnp.dot(ref.astype(jnp.bfloat16), w2.astype(jnp.bfloat16),
                preferred_element_type=jnp.float32) + b2, 0.0)
    ref = jnp.maximum(
        jnp.dot(ref.astype(jnp.bfloat16), w3.astype(jnp.bfloat16),
                preferred_element_type=jnp.float32) + b3, 0.0)

    assert logits.shape == (8, 10)
    assert jnp.allclose(logits, ref, atol=1e-2, rtol=1e-2)

    print("KERNEL_OK")
</pallas_src>

<mosaic_0001>
module attributes {stable_mosaic.version = 11 : i64} {
  func.func @mlp_kernel(%arg0: i32, %arg1: memref<16x896xbf16, #tpu.memory_space<vmem>>, %arg2: memref<896x512xbf16, #tpu.memory_space<vmem>>, %arg3: memref<1x512xf32, #tpu.memory_space<vmem>>, %arg4: memref<512x512xbf16, #tpu.memory_space<vmem>>, %arg5: memref<1x512xf32, #tpu.memory_space<vmem>>, %arg6: memref<512x128xbf16, #tpu.memory_space<vmem>>, %arg7: memref<1x128xf32, #tpu.memory_space<vmem>>, %arg8: memref<16x128xf32, #tpu.memory_space<vmem>>) attributes {dimension_semantics = [#tpu.dimension_semantics<parallel>], iteration_bounds = array<i64: 1>, scalar_prefetch = 0 : i64, scratch_operands = 0 : i64, tpu.core_type = #tpu.core_type<tc>, window_params = [{transform_indices = @transform_0, window_bounds = array<i64: 16, 896>}, {pipeline_mode = #tpu.pipeline_mode<synchronous>, transform_indices = @transform_1, window_bounds = array<i64: 896, 512>}, {pipeline_mode = #tpu.pipeline_mode<synchronous>, transform_indices = @transform_2, window_bounds = array<i64: 1, 512>}, {pipeline_mode = #tpu.pipeline_mode<synchronous>, transform_indices = @transform_3, window_bounds = array<i64: 512, 512>}, {pipeline_mode = #tpu.pipeline_mode<synchronous>, transform_indices = @transform_4, window_bounds = array<i64: 1, 512>}, {pipeline_mode = #tpu.pipeline_mode<synchronous>, transform_indices = @transform_5, window_bounds = array<i64: 512, 128>}, {pipeline_mode = #tpu.pipeline_mode<synchronous>, transform_indices = @transform_6, window_bounds = array<i64: 1, 128>}, {transform_indices = @transform_7, window_bounds = array<i64: 16, 128>}]} {
    %c0 = arith.constant 0 : index
    %c0_0 = arith.constant 0 : index
    %0 = vector.load %arg1[%c0, %c0_0] : memref<16x896xbf16, #tpu.memory_space<vmem>>, vector<16x896xbf16>
    %c0_1 = arith.constant 0 : index
    %c0_2 = arith.constant 0 : index
    %1 = vector.load %arg2[%c0_1, %c0_2] : memref<896x512xbf16, #tpu.memory_space<vmem>>, vector<896x512xbf16>
    %cst = arith.constant dense<0.000000e+00> : vector<16x512xf32>
    %2 = tpu.matmul %0, %1, %cst {dimension_numbers = #tpu.dot_dimension_numbers<[1], [0], [0], [1], [0, 0, 1, 1], [], []>} : vector<16x896xbf16>, vector<896x512xbf16>, vector<16x512xf32> -> vector<16x512xf32>
    %c0_3 = arith.constant 0 : index
    %c0_4 = arith.constant 0 : index
    %3 = vector.load %arg3[%c0_3, %c0_4] : memref<1x512xf32, #tpu.memory_space<vmem>>, vector<1x512xf32>
    %4 = vector.broadcast %3 : vector<1x512xf32> to vector<16x512xf32>
    %5 = arith.addf %2, %4 : vector<16x512xf32>
    %cst_5 = arith.constant 0.000000e+00 : f32
    %6 = vector.broadcast %cst_5 : f32 to vector<16x512xf32>
    %7 = arith.maximumf %5, %6 : vector<16x512xf32>
    %8 = arith.truncf %7 : vector<16x512xf32> to vector<16x512xbf16>
    %c0_6 = arith.constant 0 : index
    %c0_7 = arith.constant 0 : index
    %9 = vector.load %arg4[%c0_6, %c0_7] : memref<512x512xbf16, #tpu.memory_space<vmem>>, vector<512x512xbf16>
    %cst_8 = arith.constant dense<0.000000e+00> : vector<16x512xf32>
    %10 = tpu.matmul %8, %9, %cst_8 {dimension_numbers = #tpu.dot_dimension_numbers<[1], [0], [0], [1], [0, 0, 1, 1], [], []>} : vector<16x512xbf16>, vector<512x512xbf16>, vector<16x512xf32> -> vector<16x512xf32>
    %c0_9 = arith.constant 0 : index
    %c0_10 = arith.constant 0 : index
    %11 = vector.load %arg5[%c0_9, %c0_10] : memref<1x512xf32, #tpu.memory_space<vmem>>, vector<1x512xf32>
    %12 = vector.broadcast %11 : vector<1x512xf32> to vector<16x512xf32>
    %13 = arith.addf %10, %12 : vector<16x512xf32>
    %cst_11 = arith.constant 0.000000e+00 : f32
    %14 = vector.broadcast %cst_11 : f32 to vector<16x512xf32>
    %15 = arith.maximumf %13, %14 : vector<16x512xf32>
    %16 = arith.truncf %15 : vector<16x512xf32> to vector<16x512xbf16>
    %c0_12 = arith.constant 0 : index
    %c0_13 = arith.constant 0 : index
    %17 = vector.load %arg6[%c0_12, %c0_13] : memref<512x128xbf16, #tpu.memory_space<vmem>>, vector<512x128xbf16>
    %cst_14 = arith.constant dense<0.000000e+00> : vector<16x128xf32>
    %18 = tpu.matmul %16, %17, %cst_14 {dimension_numbers = #tpu.dot_dimension_numbers<[1], [0], [0], [1], [0, 0, 1, 1], [], []>} : vector<16x512xbf16>, vector<512x128xbf16>, vector<16x128xf32> -> vector<16x128xf32>
    %c0_15 = arith.constant 0 : index
    %c0_16 = arith.constant 0 : index
    %19 = vector.load %arg7[%c0_15, %c0_16] : memref<1x128xf32, #tpu.memory_space<vmem>>, vector<1x128xf32>
    %20 = vector.broadcast %19 : vector<1x128xf32> to vector<16x128xf32>
    %21 = arith.addf %18, %20 : vector<16x128xf32>
    %cst_17 = arith.constant 0.000000e+00 : f32
    %22 = vector.broadcast %cst_17 : f32 to vector<16x128xf32>
    %23 = arith.maximumf %21, %22 : vector<16x128xf32>
    %c0_18 = arith.constant 0 : index
    %c0_19 = arith.constant 0 : index
    %24 = vector.load %arg8[%c0_18, %c0_19] : memref<16x128xf32, #tpu.memory_space<vmem>>, vector<16x128xf32>
    tpu.vector_store %arg8[%c0_18, %c0_19], %23 {strides = array<i32>} : memref<16x128xf32, #tpu.memory_space<vmem>>, vector<16x128xf32>,
    return
  }
  func.func @transform_0(%arg0: i32) -> (i32, i32) {
    %c0_i32 = arith.constant 0 : i32
    %c0_i32_0 = arith.constant 0 : i32
    return %arg0, %c0_i32 : i32, i32
  }
  func.func @transform_1(%arg0: i32) -> (i32, i32) {
    %c0_i32 = arith.constant 0 : i32
    %c0_i32_0 = arith.constant 0 : i32
    %c0_i32_1 = arith.constant 0 : i32
    return %c0_i32, %c0_i32_0 : i32, i32
  }
  func.func @transform_2(%arg0: i32) -> (i32, i32) {
    %c0_i32 = arith.constant 0 : i32
    %c0_i32_0 = arith.constant 0 : i32
    %c0_i32_1 = arith.constant 0 : i32
    return %c0_i32, %c0_i32_0 : i32, i32
  }
  func.func @transform_3(%arg0: i32) -> (i32, i32) {
    %c0_i32 = arith.constant 0 : i32
    %c0_i32_0 = arith.constant 0 : i32
    %c0_i32_1 = arith.constant 0 : i32
    return %c0_i32, %c0_i32_0 : i32, i32
  }
  func.func @transform_4(%arg0: i32) -> (i32, i32) {
    %c0_i32 = arith.constant 0 : i32
    %c0_i32_0 = arith.constant 0 : i32
    %c0_i32_1 = arith.constant 0 : i32
    return %c0_i32, %c0_i32_0 : i32, i32
  }
  func.func @transform_5(%arg0: i32) -> (i32, i32) {
    %c0_i32 = arith.constant 0 : i32
    %c0_i32_0 = arith.constant 0 : i32
    %c0_i32_1 = arith.constant 0 : i32
    return %c0_i32, %c0_i32_0 : i32, i32
  }
  func.func @transform_6(%arg0: i32) -> (i32, i32) {
    %c0_i32 = arith.constant 0 : i32
    %c0_i32_0 = arith.constant 0 : i32
    %c0_i32_1 = arith.constant 0 : i32
    return %c0_i32, %c0_i32_0 : i32, i32
  }
  func.func @transform_7(%arg0: i32) -> (i32, i32) {
    %c0_i32 = arith.constant 0 : i32
    %c0_i32_0 = arith.constant 0 : i32
    return %arg0, %c0_i32 : i32, i32
  }
}

</mosaic_0001>

<llo_original>
// kernel: tpu_custom_call.1
$region0: #{tpu_custom_call.1}
  #allocation0 [shape = 'u32[]', space=smem, size = 0x4, offset = 0x4, fixed_abs, tag = 'smem constant byte address 0x4 - core index']
  #allocation1 [shape = 'u32[144,128]{1,0:T(1,128)}', space=vmem, size = 0x12000, scoped, tag = 'internal scratch']
  %s0 = inlined_call_operand.hbm [shape: bf16[16,896], index: 0, kind: input, shape index: {}]
  %s1 = inlined_call_operand.hbm [shape: bf16[896,512], index: 1, kind: input, shape index: {}]
  %s2 = inlined_call_operand.vmem [shape: f32[1,512], index: 2, kind: input, shape index: {}]
  %s3 = inlined_call_operand.hbm [shape: bf16[512,512], index: 3, kind: input, shape index: {}]
  %s4 = inlined_call_operand.vmem [shape: f32[1,512], index: 4, kind: input, shape index: {}]
  %s5 = inlined_call_operand.hbm [shape: bf16[512,128], index: 5, kind: input, shape index: {}]
  %s6 = inlined_call_operand.vmem [shape: f32[1,128], index: 6, kind: input, shape index: {}]
  %s7 = inlined_call_operand.hbm [shape: f32[16,128], index: 7, kind: output, shape index: {}]
  %s8 = sld [smem:[#allocation0]]
  $region54: #{tpu_custom_call.1} parent=0
    _
  %s10 = ssub.s32 1, %s8
  %s11 = scalar_select 0, %s10, %s8
  $region1: #{tpu_custom_call.1} parent=0
    #allocation2 [shape = 'u8[28672]{0}', space=vmem, size = 0x7000, scoped, tag = 'input window, operand 0, single buffered']
    #allocation3 [shape = 's32[1]{0}', space=sflag, size = 0x4, scoped, tag = 'scoped memory for tpu_custom_call.1']
    #allocation4 [shape = 's32[1]{0}', space=sflag, size = 0x4, scoped, tag = 'scoped memory for tpu_custom_call.1']
    #allocation5 [shape = 'u8[917504]{0}', space=vmem, size = 0xe0000, scoped, tag = 'input window, operand 1, single buffered']
    #allocation6 [shape = 's32[1]{0}', space=sflag, size = 0x4, scoped, tag = 'scoped memory for tpu_custom_call.1']
    #allocation7 [shape = 'u8[524288]{0}', space=vmem, size = 0x80000, scoped, tag = 'input window, operand 3, single buffered']
    #allocation8 [shape = 'u8[131072]{0}', space=vmem, size = 0x20000, scoped, tag = 'input window, operand 5, single buffered']
    #allocation9 [shape = 's32[1]{0}', space=sflag, size = 0x4, scoped, tag = 'scoped memory for tpu_custom_call.1']
    #allocation10 [shape = 'u8[8192]{0}', space=vmem, size = 0x2000, scoped, tag = 'output window, operand 0, single buffered']
    %12 = vsyncpa [#allocation3], 0
    %13 = vsyncpa [#allocation6], 0
    %14 = vsyncpa [#allocation9], 0
    %15 = vsyncpa [#allocation4], 0
    // Predicated region
    $region2: #{tpu_custom_call.1} parent=1 // pred_check
      _
    $region3: #{tpu_custom_call.1} parent=1 // pred_check_branch
      %17 = sbr.rel (0) target = $region5
    $region4: #{tpu_custom_call.1} parent=1 // pred_region
      %s19 = ssub.s32 896, 896
      %20 = vsyncadd [#allocation3], %s19
      %s21 = sshll.u32 [#allocation2], 4
      %s22 = int_to_ptr.vmem [resolvable:$true] %s21
      %27 = dma.hbm_to_vmem [thread:$0]  %s0, 896, %s22, [#allocation3], 448, 448, 28
    $region5: #{tpu_custom_call.1} parent=1 // pred_fallthru
      _
    // Predicated region
    $region6: #{tpu_custom_call.1} parent=1 // pred_check
      _
    $region7: #{tpu_custom_call.1} parent=1 // pred_check_branch
      %29 = sbr.rel (0) target = $region9
    $region8: #{tpu_custom_call.1} parent=1 // pred_region
      %s31 = ssub.s32 28672, 28672
      %32 = vsyncadd [#allocation6], %s31
      %s33 = sshll.u32 [#allocation5], 4
      %s34 = int_to_ptr.vmem [resolvable:$true] %s33
      %39 = dma.hbm_to_vmem [thread:$0]  %s1, 28672, %s34, [#allocation6], 256, 256, 16
    $region9: #{tpu_custom_call.1} parent=1 // pred_fallthru
      _
    // Predicated region
    $region10: #{tpu_custom_call.1} parent=1 // pred_check
      _
    $region11: #{tpu_custom_call.1} parent=1 // pred_check_branch
      %41 = sbr.rel (0) target = $region13
    $region12: #{tpu_custom_call.1} parent=1 // pred_region
      _
    $region13: #{tpu_custom_call.1} parent=1 // pred_fallthru
      _
    // Predicated region
    $region14: #{tpu_custom_call.1} parent=1 // pred_check
      _
    $region15: #{tpu_custom_call.1} parent=1 // pred_check_branch
      %43 = sbr.rel (0) target = $region17
    $region16: #{tpu_custom_call.1} parent=1 // pred_region
      %s45 = ssub.s32 16384, 16384
      %46 = vsyncadd [#allocation6], %s45
      %s47 = sshll.u32 [#allocation7], 4
      %s48 = int_to_ptr.vmem [resolvable:$true] %s47
      %53 = dma.hbm_to_vmem [thread:$0]  %s3, 16384, %s48, [#allocation6], 256, 256, 16
    $region17: #{tpu_custom_call.1} parent=1 // pred_fallthru
      _
    // Predicated region
    $region18: #{tpu_custom_call.1} parent=1 // pred_check
      _
    $region19: #{tpu_custom_call.1} parent=1 // pred_check_branch
      %55 = sbr.rel (0) target = $region21
    $region20: #{tpu_custom_call.1} parent=1 // pred_region
      _
    $region21: #{tpu_custom_call.1} parent=1 // pred_fallthru
      _
    // Predicated region
    $region22: #{tpu_custom_call.1} parent=1 // pred_check
      _
    $region23: #{tpu_custom_call.1} parent=1 // pred_check_branch
      %57 = sbr.rel (0) target = $region25
    $region24: #{tpu_custom_call.1} parent=1 // pred_region
      %s59 = ssub.s32 4096, 4096
      %60 = vsyncadd [#allocation9], %s59
      %s61 = sshll.u32 [#allocation8], 4
      %s62 = int_to_ptr.vmem [resolvable:$true] %s61
      %67 = dma.hbm_to_vmem [thread:$0]  %s5, 4096, %s62, [#allocation9], 64, 64, 4
    $region25: #{tpu_custom_call.1} parent=1 // pred_fallthru
      _
    // Predicated region
    $region26: #{tpu_custom_call.1} parent=1 // pred_check
      _
    $region27: #{tpu_custom_call.1} parent=1 // pred_check_branch
      %69 = sbr.rel (0) target = $region29
    $region28: #{tpu_custom_call.1} parent=1 // pred_region
      _
    $region29: #{tpu_custom_call.1} parent=1 // pred_fallthru
      _
    // Predicated region
    $region30: #{tpu_custom_call.1} parent=1 // pred_check
      _
    $region31: #{tpu_custom_call.1} parent=1 // pred_check_branch
      %71 = sbr.rel (0) target = $region33
    $region32: #{tpu_custom_call.1} parent=1 // pred_region
      %72 = dma.done [#allocation3], 896
    $region33: #{tpu_custom_call.1} parent=1 // pred_fallthru
      _
    // Predicated region
    $region34: #{tpu_custom_call.1} parent=1 // pred_check
      _
    $region35: #{tpu_custom_call.1} parent=1 // pred_check_branch
      %74 = sbr.rel (0) target = $region37
    $region36: #{tpu_custom_call.1} parent=1 // pred_region
      %75 = dma.done [#allocation6], 28672
    $region37: #{tpu_custom_call.1} parent=1 // pred_fallthru
      _
    // Predicated region
    $region38: #{tpu_custom_call.1} parent=1 // pred_check
      _
    $region39: #{tpu_custom_call.1} parent=1 // pred_check_branch
      %77 = sbr.rel (0) target = $region41
    $region40: #{tpu_custom_call.1} parent=1 // pred_region
      %78 = dma.done [#allocation6], 16384
    $region41: #{tpu_custom_call.1} parent=1 // pred_fallthru
      _
    // Predicated region
    $region42: #{tpu_custom_call.1} parent=1 // pred_check
      _
    $region43: #{tpu_custom_call.1} parent=1 // pred_check_branch
      %80 = sbr.rel (0) target = $region45
    $region44: #{tpu_custom_call.1} parent=1 // pred_region
      %81 = dma.done [#allocation9], 4096
    $region45: #{tpu_custom_call.1} parent=1 // pred_fallthru
      _
    %v83 = vld [vmem:[#allocation2] sm:$0xff]
    %v84 = vld [vmem:[#allocation2 + $0x8] sm:$0xff]
    %v85 = vld [vmem:[#allocation2 + $0x10] sm:$0xff]
    %v86 = vld [vmem:[#allocation2 + $0x18] sm:$0xf]
    %v87 = vld [vmem:[#allocation2 + $0x1c] sm:$0xff]
    %v88 = vld [vmem:[#allocation2 + $0x24] sm:$0xff]
    %v89 = vld [vmem:[#allocation2 + $0x2c] sm:$0xff]
    %v90 = vld [vmem:[#allocation2 + $0x34] sm:$0xf]
    %v91 = vld [vmem:[#allocation5] sm:$0xff]
    %v92 = vld [vmem:[#allocation5 + $0x8] sm:$0xff]
    %v93 = vld [vmem:[#allocation5 + $0x10] sm:$0xff]
    %v94 = vld [vmem:[#allocation5 + $0x18] sm:$0xff]
    %v95 = vld [vmem:[#allocation5 + $0x20] sm:$0xff]
    %v96 = vld [vmem:[#allocation5 + $0x28] sm:$0xff]
    %v97 = vld [vmem:[#allocation5 + $0x30] sm:$0xff]
    %v98 = vld [vmem:[#allocation5 + $0x38] sm:$0xff]
    %v99 = vld [vmem:[#allocation5 + $0x40] sm:$0xff]
    %v100 = vld [vmem:[#allocation5 + $0x48] sm:$0xff]
    %v101 = vld [vmem:[#allocation5 + $0x50] sm:$0xff]
    %v102 = vld [vmem:[#allocation5 + $0x58] sm:$0xff]
    %v103 = vld [vmem:[#allocation5 + $0x60] sm:$0xff]
    %v104 = vld [vmem:[#allocation5 + $0x68] sm:$0xff]
    %v105 = vld [vmem:[#allocation5 + $0x70] sm:$0xff]
    %v106 = vld [vmem:[#allocation5 + $0x78] sm:$0xff]
    %v107 = vld [vmem:[#allocation5 + $0x80] sm:$0xff]
    %v108 = vld [vmem:[#allocation5 + $0x88] sm:$0xff]
    %v109 = vld [vmem:[#allocation5 + $0x90] sm:$0xff]
    %v110 = vld [vmem:[#allocation5 + $0x98] sm:$0xff]
    %v111 = vld [vmem:[#allocation5 + $0xa0] sm:$0xff]
    %v112 = vld [vmem:[#allocation5 + $0xa8] sm:$0xff]
    %v113 = vld [vmem:[#allocation5 + $0xb0] sm:$0xff]
    %v114 = vld [vmem:[#allocation5 + $0xb8] sm:$0xff]
    %v115 = vld [vmem:[#allocation5 + $0xc0] sm:$0xff]
    %v116 = vld [vmem:[#allocation5 + $0xc8] sm:$0xff]
    %v117 = vld [vmem:[#allocation5 + $0xd0] sm:$0xff]
    %v118 = vld [vmem:[#allocation5 + $0xd8] sm:$0xff]
    %v119 = vld [vmem:[#allocation5 + $0xe0] sm:$0xff]
    %v120 = vld [vmem:[#allocation5 + $0xe8] sm:$0xff]
    %v121 = vld [vmem:[#allocation5 + $0xf0] sm:$0xff]
    %v122 = vld [vmem:[#allocation5 + $0xf8] sm:$0xff]
    %v123 = vld [vmem:[#allocation5 + $0x100] sm:$0xff]
    %v124 = vld [vmem:[#allocation5 + $0x108] sm:$0xff]
    %v125 = vld [vmem:[#allocation5 + $0x110] sm:$0xff]
    %v126 = vld [vmem:[#allocation5 + $0x118] sm:$0xff]
    %v127 = vld [vmem:[#allocation5 + $0x120] sm:$0xff]
    %v128 = vld [vmem:[#allocation5 + $0x128] sm:$0xff]
    %v129 = vld [vmem:[#allocation5 + $0x130] sm:$0xff]
    %v130 = vld [vmem:[#allocation5 + $0x138] sm:$0xff]
    %v131 = vld [vmem:[#allocation5 + $0x140] sm:$0xff]
    %v132 = vld [vmem:[#allocation5 + $0x148] sm:$0xff]
    %v133 = vld [vmem:[#allocation5 + $0x150] sm:$0xff]
    %v134 = vld [vmem:[#allocation5 + $0x158] sm:$0xff]
    %v135 = vld [vmem:[#allocation5 + $0x160] sm:$0xff]
    %v136 = vld [vmem:[#allocation5 + $0x168] sm:$0xff]
    %v137 = vld [vmem:[#allocation5 + $0x170] sm:$0xff]
    %v138 = vld [vmem:[#allocation5 + $0x178] sm:$0xff]
    %v139 = vld [vmem:[#allocation5 + $0x180] sm:$0xff]
    %v140 = vld [vmem:[#allocation5 + $0x188] sm:$0xff]
    %v141 = vld [vmem:[#allocation5 + $0x190] sm:$0xff]
    %v142 = vld [vmem:[#allocation5 + $0x198] sm:$0xff]
    %v143 = vld [vmem:[#allocation5 + $0x1a0] sm:$0xff]
    %v144 = vld [vmem:[#allocation5 + $0x1a8] sm:$0xff]
    %v145 = vld [vmem:[#allocation5 + $0x1b0] sm:$0xff]
    %v146 = vld [vmem:[#allocation5 + $0x1b8] sm:$0xff]
    %v147 = vld [vmem:[#allocation5 + $0x1c0] sm:$0xff]
    %v148 = vld [vmem:[#allocation5 + $0x1c8] sm:$0xff]
    %v149 = vld [vmem:[#allocation5 + $0x1d0] sm:$0xff]
    %v150 = vld [vmem:[#allocation5 + $0x1d8] sm:$0xff]
    %v151 = vld [vmem:[#allocation5 + $0x1e0] sm:$0xff]
    %v152 = vld [vmem:[#allocation5 + $0x1e8] sm:$0xff]
    %v153 = vld [vmem:[#allocation5 + $0x1f0] sm:$0xff]
    %v154 = vld [vmem:[#allocation5 + $0x1f8] sm:$0xff]
    %v155 = vld [vmem:[#allocation5 + $0x200] sm:$0xff]
    %v156 = vld [vmem:[#allocation5 + $0x208] sm:$0xff]
    %v157 = vld [vmem:[#allocation5 + $0x210] sm:$0xff]
    %v158 = vld [vmem:[#allocation5 + $0x218] sm:$0xff]
    %v159 = vld [vmem:[#allocation5 + $0x220] sm:$0xff]
    %v160 = vld [vmem:[#allocation5 + $0x228] sm:$0xff]
    %v161 = vld [vmem:[#allocation5 + $0x230] sm:$0xff]
    %v162 = vld [vmem:[#allocation5 + $0x238] sm:$0xff]
    %v163 = vld [vmem:[#allocation5 + $0x240] sm:$0xff]
    %v164 = vld [vmem:[#allocation5 + $0x248] sm:$0xff]
    %v165 = vld [vmem:[#allocation5 + $0x250] sm:$0xff]
    %v166 = vld [vmem:[#allocation5 + $0x258] sm:$0xff]
    %v167 = vld [vmem:[#allocation5 + $0x260] sm:$0xff]
    %v168 = vld [vmem:[#allocation5 + $0x268] sm:$0xff]
    %v169 = vld [vmem:[#allocation5 + $0x270] sm:$0xff]
    %v170 = vld [vmem:[#allocation5 + $0x278] sm:$0xff]
    %v171 = vld [vmem:[#allocation5 + $0x280] sm:$0xff]
    %v172 = vld [vmem:[#allocation5 + $0x288] sm:$0xff]
    %v173 = vld [vmem:[#allocation5 + $0x290] sm:$0xff]
    %v174 = vld [vmem:[#allocation5 + $0x298] sm:$0xff]
    %v175 = vld [vmem:[#allocation5 + $0x2a0] sm:$0xff]
    %v176 = vld [vmem:[#allocation5 + $0x2a8] sm:$0xff]
    %v177 = vld [vmem:[#allocation5 + $0x2b0] sm:$0xff]
    %v178 = vld [vmem:[#allocation5 + $0x2b8] sm:$0xff]
    %v179 = vld [vmem:[#allocation5 + $0x2c0] sm:$0xff]
    %v180 = vld [vmem:[#allocation5 + $0x2c8] sm:$0xff]
    %v181 = vld [vmem:[#allocation5 + $0x2d0] sm:$0xff]
    %v182 = vld [vmem:[#allocation5 + $0x2d8] sm:$0xff]
    %v183 = vld [vmem:[#allocation5 + $0x2e0] sm:$0xff]
    %v184 = vld [vmem:[#allocation5 + $0x2e8] sm:$0xff]
    %v185 = vld [vmem:[#allocation5 + $0x2f0] sm:$0xff]
    %v186 = vld [vmem:[#allocation5 + $0x2f8] sm:$0xff]
    %v187 = vld [vmem:[#allocation5 + $0x300] sm:$0xff]
    %v188 = vld [vmem:[#allocation5 + $0x308] sm:$0xff]
    %v189 = vld [vmem:[#allocation5 + $0x310] sm:$0xff]
    %v190 = vld [vmem:[#allocation5 + $0x318] sm:$0xff]
    %v191 = vld [vmem:[#allocation5 + $0x320] sm:$0xff]
    %v192 = vld [vmem:[#allocation5 + $0x328] sm:$0xff]
    %v193 = vld [vmem:[#allocation5 + $0x330] sm:$0xff]
    %v194 = vld [vmem:[#allocation5 + $0x338] sm:$0xff]
    %v195 = vld [vmem:[#allocation5 + $0x340] sm:$0xff]
    %v196 = vld [vmem:[#allocation5 + $0x348] sm:$0xff]
    %v197 = vld [vmem:[#allocation5 + $0x350] sm:$0xff]
    %v198 = vld [vmem:[#allocation5 + $0x358] sm:$0xff]
    %v199 = vld [vmem:[#allocation5 + $0x360] sm:$0xff]
    %v200 = vld [vmem:[#allocation5 + $0x368] sm:$0xff]
    %v201 = vld [vmem:[#allocation5 + $0x370] sm:$0xff]
    %v202 = vld [vmem:[#allocation5 + $0x378] sm:$0xff]
    %v203 = vld [vmem:[#allocation5 + $0x380] sm:$0xff]
    %v204 = vld [vmem:[#allocation5 + $0x388] sm:$0xff]
    %v205 = vld [vmem:[#allocation5 + $0x390] sm:$0xff]
    %v206 = vld [vmem:[#allocation5 + $0x398] sm:$0xff]
    %v207 = vld [vmem:[#allocation5 + $0x3a0] sm:$0xff]
    %v208 = vld [vmem:[#allocation5 + $0x3a8] sm:$0xff]
    %v209 = vld [vmem:[#allocation5 + $0x3b0] sm:$0xff]
    %v210 = vld [vmem:[#allocation5 + $0x3b8] sm:$0xff]
    %v211 = vld [vmem:[#allocation5 + $0x3c0] sm:$0xff]
    %v212 = vld [vmem:[#allocation5 + $0x3c8] sm:$0xff]
    %v213 = vld [vmem:[#allocation5 + $0x3d0] sm:$0xff]
    %v214 = vld [vmem:[#allocation5 + $0x3d8] sm:$0xff]
    %v215 = vld [vmem:[#allocation5 + $0x3e0] sm:$0xff]
    %v216 = vld [vmem:[#allocation5 + $0x3e8] sm:$0xff]
    %v217 = vld [vmem:[#allocation5 + $0x3f0] sm:$0xff]
    %v218 = vld [vmem:[#allocation5 + $0x3f8] sm:$0xff]
    %v219 = vld [vmem:[#allocation5 + $0x400] sm:$0xff]
    %v220 = vld [vmem:[#allocation5 + $0x408] sm:$0xff]
    %v221 = vld [vmem:[#allocation5 + $0x410] sm:$0xff]
    %v222 = vld [vmem:[#allocation5 + $0x418] sm:$0xff]
    %v223 = vld [vmem:[#allocation5 + $0x420] sm:$0xff]
    %v224 = vld [vmem:[#allocation5 + $0x428] sm:$0xff]
    %v225 = vld [vmem:[#allocation5 + $0x430] sm:$0xff]
    %v226 = vld [vmem:[#allocation5 + $0x438] sm:$0xff]
    %v227 = vld [vmem:[#allocation5 + $0x440] sm:$0xff]
    %v228 = vld [vmem:[#allocation5 + $0x448] sm:$0xff]
    %v229 = vld [vmem:[#allocation5 + $0x450] sm:$0xff]
    %v230 = vld [vmem:[#allocation5 + $0x458] sm:$0xff]
    %v231 = vld [vmem:[#allocation5 + $0x460] sm:$0xff]
    %v232 = vld [vmem:[#allocation5 + $0x468] sm:$0xff]
    %v233 = vld [vmem:[#allocation5 + $0x470] sm:$0xff]
    %v234 = vld [vmem:[#allocation5 + $0x478] sm:$0xff]
    %v235 = vld [vmem:[#allocation5 + $0x480] sm:$0xff]
    %v236 = vld [vmem:[#allocation5 + $0x488] sm:$0xff]
    %v237 = vld [vmem:[#allocation5 + $0x490] sm:$0xff]
    %v238 = vld [vmem:[#allocation5 + $0x498] sm:$0xff]
    %v239 = vld [vmem:[#allocation5 + $0x4a0] sm:$0xff]
    %v240 = vld [vmem:[#allocation5 + $0x4a8] sm:$0xff]
    %v241 = vld [vmem:[#allocation5 + $0x4b0] sm:$0xff]
    %v242 = vld [vmem:[#allocation5 + $0x4b8] sm:$0xff]
    %v243 = vld [vmem:[#allocation5 + $0x4c0] sm:$0xff]
    %v244 = vld [vmem:[#allocation5 + $0x4c8] sm:$0xff]
    %v245 = vld [vmem:[#allocation5 + $0x4d0] sm:$0xff]
    %v246 = vld [vmem:[#allocation5 + $0x4d8] sm:$0xff]
    %v247 = vld [vmem:[#allocation5 + $0x4e0] sm:$0xff]
    %v248 = vld [vmem:[#allocation5 + $0x4e8] sm:$0xff]
    %v249 = vld [vmem:[#allocation5 + $0x4f0] sm:$0xff]
    %v250 = vld [vmem:[#allocation5 + $0x4f8] sm:$0xff]
    %v251 = vld [vmem:[#allocation5 + $0x500] sm:$0xff]
    %v252 = vld [vmem:[#allocation5 + $0x508] sm:$0xff]
    %v253 = vld [vmem:[#allocation5 + $0x510] sm:$0xff]
    %v254 = vld [vmem:[#allocation5 + $0x518] sm:$0xff]
    %v255 = vld [vmem:[#allocation5 + $0x520] sm:$0xff]
    %v256 = vld [vmem:[#allocation5 + $0x528] sm:$0xff]
    %v257 = vld [vmem:[#allocation5 + $0x530] sm:$0xff]
    %v258 = vld [vmem:[#allocation5 + $0x538] sm:$0xff]
    %v259 = vld [vmem:[#allocation5 + $0x540] sm:$0xff]
    %v260 = vld [vmem:[#allocation5 + $0x548] sm:$0xff]
    %v261 = vld [vmem:[#allocation5 + $0x550] sm:$0xff]
    %v262 = vld [vmem:[#allocation5 + $0x558] sm:$0xff]
    %v263 = vld [vmem:[#allocation5 + $0x560] sm:$0xff]
    %v264 = vld [vmem:[#allocation5 + $0x568] sm:$0xff]
    %v265 = vld [vmem:[#allocation5 + $0x570] sm:$0xff]
    %v266 = vld [vmem:[#allocation5 + $0x578] sm:$0xff]
    %v267 = vld [vmem:[#allocation5 + $0x580] sm:$0xff]
    %v268 = vld [vmem:[#allocation5 + $0x588] sm:$0xff]
    %v269 = vld [vmem:[#allocation5 + $0x590] sm:$0xff]
    %v270 = vld [vmem:[#allocation5 + $0x598] sm:$0xff]
    %v271 = vld [vmem:[#allocation5 + $0x5a0] sm:$0xff]
    %v272 = vld [vmem:[#allocation5 + $0x5a8] sm:$0xff]
    %v273 = vld [vmem:[#allocation5 + $0x5b0] sm:$0xff]
    %v274 = vld [vmem:[#allocation5 + $0x5b8] sm:$0xff]
    %v275 = vld [vmem:[#allocation5 + $0x5c0] sm:$0xff]
    %v276 = vld [vmem:[#allocation5 + $0x5c8] sm:$0xff]
    %v277 = vld [vmem:[#allocation5 + $0x5d0] sm:$0xff]
    %v278 = vld [vmem:[#allocation5 + $0x5d8] sm:$0xff]
    %v279 = vld [vmem:[#allocation5 + $0x5e0] sm:$0xff]
    %v280 = vld [vmem:[#allocation5 + $0x5e8] sm:$0xff]
    %v281 = vld [vmem:[#allocation5 + $0x5f0] sm:$0xff]
    %v282 = vld [vmem:[#allocation5 + $0x5f8] sm:$0xff]
    %v283 = vld [vmem:[#allocation5 + $0x600] sm:$0xff]
    %v284 = vld [vmem:[#allocation5 + $0x608] sm:$0xff]
    %v285 = vld [vmem:[#allocation5 + $0x610] sm:$0xff]
    %v286 = vld [vmem:[#allocation5 + $0x618] sm:$0xff]
    %v287 = vld [vmem:[#allocation5 + $0x620] sm:$0xff]
    %v288 = vld [vmem:[#allocation5 + $0x628] sm:$0xff]
    %v289 = vld [vmem:[#allocation5 + $0x630] sm:$0xff]
    %v290 = vld [vmem:[#allocation5 + $0x638] sm:$0xff]
    %v291 = vld [vmem:[#allocation5 + $0x640] sm:$0xff]
    %v292 = vld [vmem:[#allocation5 + $0x648] sm:$0xff]
    %v293 = vld [vmem:[#allocation5 + $0x650] sm:$0xff]
    %v294 = vld [vmem:[#allocation5 + $0x658] sm:$0xff]
    %v295 = vld [vmem:[#allocation5 + $0x660] sm:$0xff]
    %v296 = vld [vmem:[#allocation5 + $0x668] sm:$0xff]
    %v297 = vld [vmem:[#allocation5 + $0x670] sm:$0xff]
    %v298 = vld [vmem:[#allocation5 + $0x678] sm:$0xff]
    %v299 = vld [vmem:[#allocation5 + $0x680] sm:$0xff]
    %v300 = vld [vmem:[#allocation5 + $0x688] sm:$0xff]
    %v301 = vld [vmem:[#allocation5 + $0x690] sm:$0xff]
    %v302 = vld [vmem:[#allocation5 + $0x698] sm:$0xff]
    %v303 = vld [vmem:[#allocation5 + $0x6a0] sm:$0xff]
    %v304 = vld [vmem:[#allocation5 + $0x6a8] sm:$0xff]
    %v305 = vld [vmem:[#allocation5 + $0x6b0] sm:$0xff]
    %v306 = vld [vmem:[#allocation5 + $0x6b8] sm:$0xff]
    %v307 = vld [vmem:[#allocation5 + $0x6c0] sm:$0xff]
    %v308 = vld [vmem:[#allocation5 + $0x6c8] sm:$0xff]
    %v309 = vld [vmem:[#allocation5 + $0x6d0] sm:$0xff]
    %v310 = vld [vmem:[#allocation5 + $0x6d8] sm:$0xff]
    %v311 = vld [vmem:[#allocation5 + $0x6e0] sm:$0xff]
    %v312 = vld [vmem:[#allocation5 + $0x6e8] sm:$0xff]
    %v313 = vld [vmem:[#allocation5 + $0x6f0] sm:$0xff]
    %v314 = vld [vmem:[#allocation5 + $0x6f8] sm:$0xff]
    %v315 = vld [vmem:[%s2] sm:$0xf]
    %v317 = vlaneseq
    %v318 = vshrl.u32 %v317, 7
    %v319 = vsub.s32 0, %v318
    %v320 = vrot.slane %v315, %v319
    %v321 = vlaneseq
    %v322 = vshrl.u32 %v321, 7
    %v323 = vsub.s32 1, %v322
    %v324 = vrot.slane %v315, %v323
    %v325 = vlaneseq
    %v326 = vshrl.u32 %v325, 7
    %v327 = vsub.s32 2, %v326
    %v328 = vrot.slane %v315, %v327
    %v329 = vlaneseq
    %v330 = vshrl.u32 %v329, 7
    %v331 = vsub.s32 3, %v330
    %v332 = vrot.slane %v315, %v331
    %v345 = vunpack.c.l.b16 %v83
    %v346 = vunpack.c.h.b16 %v83
    %v347 = vunpack.c.l.b16 %v84
    %v348 = vunpack.c.h.b16 %v84
    %v349 = vunpack.c.l.b16 %v85
    %v350 = vunpack.c.h.b16 %v85
    %v351 = vunpack.c.l.b16 %v86
    %v352 = vunpack.c.l.b16 %v87
    %v353 = vunpack.c.h.b16 %v87
    %v354 = vunpack.c.l.b16 %v88
    %v355 = vunpack.c.h.b16 %v88
    %v356 = vunpack.c.l.b16 %v89
    %v357 = vunpack.c.h.b16 %v89
    %v358 = vunpack.c.l.b16 %v90
    %v359 = vpack.c.b16 %v352, %v345
    %v360 = vpack.c.b16 %v353, %v346
    %v361 = vpack.c.b16 %v354, %v347
    %v362 = vpack.c.b16 %v355, %v348
    %v363 = vpack.c.b16 %v356, %v349
    %v364 = vpack.c.b16 %v357, %v350
    %v365 = vpack.c.b16 %v358, %v351
    %v597 = vunpack.c.l.b16 %v91
    %v598 = vunpack.c.h.b16 %v91
    %v599 = vunpack.c.l.b16 %v92
    %v600 = vunpack.c.h.b16 %v92
    %v601 = vunpack.c.l.b16 %v93
    %v602 = vunpack.c.h.b16 %v93
    %v603 = vunpack.c.l.b16 %v94
    %v604 = vunpack.c.h.b16 %v94
    %v605 = vunpack.c.l.b16 %v95
    %v606 = vunpack.c.h.b16 %v95
    %v607 = vunpack.c.l.b16 %v96
    %v608 = vunpack.c.h.b16 %v96
    %v609 = vunpack.c.l.b16 %v97
    %v610 = vunpack.c.h.b16 %v97
    %v611 = vunpack.c.l.b16 %v98
    %v612 = vunpack.c.h.b16 %v98
    %v613 = vunpack.c.l.b16 %v99
    %v614 = vunpack.c.h.b16 %v99
    %v615 = vunpack.c.l.b16 %v100
    %v616 = vunpack.c.h.b16 %v100
    %v617 = vunpack.c.l.b16 %v101
    %v618 = vunpack.c.h.b16 %v101
    %v619 = vunpack.c.l.b16 %v102
    %v620 = vunpack.c.h.b16 %v102
    %v621 = vunpack.c.l.b16 %v103
    %v622 = vunpack.c.h.b16 %v103
    %v623 = vunpack.c.l.b16 %v104
    %v624 = vunpack.c.h.b16 %v104
    %v625 = vunpack.c.l.b16 %v105
    %v626 = vunpack.c.h.b16 %v105
    %v627 = vunpack.c.l.b16 %v106
    %v628 = vunpack.c.h.b16 %v106
    %v629 = vunpack.c.l.b16 %v107
    %v630 = vunpack.c.h.b16 %v107
    %v631 = vunpack.c.l.b16 %v108
    %v632 = vunpack.c.h.b16 %v108
    %v633 = vunpack.c.l.b16 %v109
    %v634 = vunpack.c.h.b16 %v109
    %v635 = vunpack.c.l.b16 %v110
    %v636 = vunpack.c.h.b16 %v110
    %v637 = vunpack.c.l.b16 %v111
    %v638 = vunpack.c.h.b16 %v111
    %v639 = vunpack.c.l.b16 %v112
    %v640 = vunpack.c.h.b16 %v112
    %v641 = vunpack.c.l.b16 %v113
    %v642 = vunpack.c.h.b16 %v113
    %v643 = vunpack.c.l.b16 %v114
    %v644 = vunpack.c.h.b16 %v114
    %v645 = vunpack.c.l.b16 %v115
    %v646 = vunpack.c.h.b16 %v115
    %v647 = vunpack.c.l.b16 %v116
    %v648 = vunpack.c.h.b16 %v116
    %v649 = vunpack.c.l.b16 %v117
    %v650 = vunpack.c.h.b16 %v117
    %v651 = vunpack.c.l.b16 %v118
    %v652 = vunpack.c.h.b16 %v118
    %v653 = vunpack.c.l.b16 %v119
    %v654 = vunpack.c.h.b16 %v119
    %v655 = vunpack.c.l.b16 %v120
    %v656 = vunpack.c.h.b16 %v120
    %v657 = vunpack.c.l.b16 %v121
    %v658 = vunpack.c.h.b16 %v121
    %v659 = vunpack.c.l.b16 %v122
    %v660 = vunpack.c.h.b16 %v122
    %v661 = vunpack.c.l.b16 %v123
    %v662 = vunpack.c.h.b16 %v123
    %v663 = vunpack.c.l.b16 %v124
    %v664 = vunpack.c.h.b16 %v124
    %v665 = vunpack.c.l.b16 %v125
    %v666 = vunpack.c.h.b16 %v125
    %v667 = vunpack.c.l.b16 %v126
    %v668 = vunpack.c.h.b16 %v126
    %v669 = vunpack.c.l.b16 %v127
    %v670 = vunpack.c.h.b16 %v127
    %v671 = vunpack.c.l.b16 %v128
    %v672 = vunpack.c.h.b16 %v128
    %v673 = vunpack.c.l.b16 %v129
    %v674 = vunpack.c.h.b16 %v129
    %v675 = vunpack.c.l.b16 %v130
    %v676 = vunpack.c.h.b16 %v130
    %v677 = vunpack.c.l.b16 %v131
    %v678 = vunpack.c.h.b16 %v131
    %v679 = vunpack.c.l.b16 %v132
    %v680 = vunpack.c.h.b16 %v132
    %v681 = vunpack.c.l.b16 %v133
    %v682 = vunpack.c.h.b16 %v133
    %v683 = vunpack.c.l.b16 %v134
    %v684 = vunpack.c.h.b16 %v134
    %v685 = vunpack.c.l.b16 %v135
    %v686 = vunpack.c.h.b16 %v135
    %v687 = vunpack.c.l.b16 %v136
    %v688 = vunpack.c.h.b16 %v136
    %v689 = vunpack.c.l.b16 %v137
    %v690 = vunpack.c.h.b16 %v137
    %v691 = vunpack.c.l.b16 %v138
    %v692 = vunpack.c.h.b16 %v138
    %v693 = vunpack.c.l.b16 %v139
    %v694 = vunpack.c.h.b16 %v139
    %v695 = vunpack.c.l.b16 %v140
    %v696 = vunpack.c.h.b16 %v140
    %v697 = vunpack.c.l.b16 %v141
    %v698 = vunpack.c.h.b16 %v141
    %v699 = vunpack.c.l.b16 %v142
    %v700 = vunpack.c.h.b16 %v142
    %v701 = vunpack.c.l.b16 %v143
    %v702 = vunpack.c.h.b16 %v143
    %v703 = vunpack.c.l.b16 %v144
    %v704 = vunpack.c.h.b16 %v144
    %v705 = vunpack.c.l.b16 %v145
    %v706 = vunpack.c.h.b16 %v145
    %v707 = vunpack.c.l.b16 %v146
    %v708 = vunpack.c.h.b16 %v146
    %v709 = vunpack.c.l.b16 %v147
    %v710 = vunpack.c.h.b16 %v147
    %v711 = vunpack.c.l.b16 %v148
    %v712 = vunpack.c.h.b16 %v148
    %v713 = vunpack.c.l.b16 %v149
    %v714 = vunpack.c.h.b16 %v149
    %v715 = vunpack.c.l.b16 %v150
    %v716 = vunpack.c.h.b16 %v150
    %v717 = vunpack.c.l.b16 %v151
    %v718 = vunpack.c.h.b16 %v151
    %v719 = vunpack.c.l.b16 %v152
    %v720 = vunpack.c.h.b16 %v152
    %v721 = vunpack.c.l.b16 %v153
    %v722 = vunpack.c.h.b16 %v153
    %v723 = vunpack.c.l.b16 %v154
    %v724 = vunpack.c.h.b16 %v154
    %v725 = vunpack.c.l.b16 %v155
    %v726 = vunpack.c.h.b16 %v155
    %v727 = vunpack.c.l.b16 %v156
    %v728 = vunpack.c.h.b16 %v156
    %v729 = vunpack.c.l.b16 %v157
    %v730 = vunpack.c.h.b16 %v157
    %v731 = vunpack.c.l.b16 %v158
    %v732 = vunpack.c.h.b16 %v158
    %v733 = vunpack.c.l.b16 %v159
    %v734 = vunpack.c.h.b16 %v159
    %v735 = vunpack.c.l.b16 %v160
    %v736 = vunpack.c.h.b16 %v160
    %v737 = vunpack.c.l.b16 %v161
    %v738 = vunpack.c.h.b16 %v161
    %v739 = vunpack.c.l.b16 %v162
    %v740 = vunpack.c.h.b16 %v162
    %v741 = vunpack.c.l.b16 %v163
    %v742 = vunpack.c.h.b16 %v163
    %v743 = vunpack.c.l.b16 %v164
    %v744 = vunpack.c.h.b16 %v164
    %v745 = vunpack.c.l.b16 %v165
    %v746 = vunpack.c.h.b16 %v165
    %v747 = vunpack.c.l.b16 %v166
    %v748 = vunpack.c.h.b16 %v166
    %v749 = vunpack.c.l.b16 %v167
    %v750 = vunpack.c.h.b16 %v167
    %v751 = vunpack.c.l.b16 %v168
    %v752 = vunpack.c.h.b16 %v168
    %v753 = vunpack.c.l.b16 %v169
    %v754 = vunpack.c.h.b16 %v169
    %v755 = vunpack.c.l.b16 %v170
    %v756 = vunpack.c.h.b16 %v170
    %v757 = vunpack.c.l.b16 %v171
    %v758 = vunpack.c.h.b16 %v171
    %v759 = vunpack.c.l.b16 %v172
    %v760 = vunpack.c.h.b16 %v172
    %v761 = vunpack.c.l.b16 %v173
    %v762 = vunpack.c.h.b16 %v173
    %v763 = vunpack.c.l.b16 %v174
    %v764 = vunpack.c.h.b16 %v174
    %v765 = vunpack.c.l.b16 %v175
    %v766 = vunpack.c.h.b16 %v175
    %v767 = vunpack.c.l.b16 %v176
    %v768 = vunpack.c.h.b16 %v176
    %v769 = vunpack.c.l.b16 %v177
    %v770 = vunpack.c.h.b16 %v177
    %v771 = vunpack.c.l.b16 %v178
    %v772 = vunpack.c.h.b16 %v178
    %v773 = vunpack.c.l.b16 %v179
    %v774 = vunpack.c.h.b16 %v179
    %v775 = vunpack.c.l.b16 %v180
    %v776 = vunpack.c.h.b16 %v180
    %v777 = vunpack.c.l.b16 %v181
    %v778 = vunpack.c.h.b16 %v181
    %v779 = vunpack.c.l.b16 %v182
    %v780 = vunpack.c.h.b16 %v182
    %v781 = vunpack.c.l.b16 %v183
    %v782 = vunpack.c.h.b16 %v183
    %v783 = vunpack.c.l.b16 %v184
    %v784 = vunpack.c.h.b16 %v184
    %v785 = vunpack.c.l.b16 %v185
    %v786 = vunpack.c.h.b16 %v185
    %v787 = vunpack.c.l.b16 %v186
    %v788 = vunpack.c.h.b16 %v186
    %v789 = vunpack.c.l.b16 %v187
    %v790 = vunpack.c.h.b16 %v187
    %v791 = vunpack.c.l.b16 %v188
    %v792 = vunpack.c.h.b16 %v188
    %v793 = vunpack.c.l.b16 %v189
    %v794 = vunpack.c.h.b16 %v189
    %v795 = vunpack.c.l.b16 %v190
    %v796 = vunpack.c.h.b16 %v190
    %v797 = vunpack.c.l.b16 %v191
    %v798 = vunpack.c.h.b16 %v191
    %v799 = vunpack.c.l.b16 %v192
    %v800 = vunpack.c.h.b16 %v192
    %v801 = vunpack.c.l.b16 %v193
    %v802 = vunpack.c.h.b16 %v193
    %v803 = vunpack.c.l.b16 %v194
    %v804 = vunpack.c.h.b16 %v194
    %v805 = vunpack.c.l.b16 %v195
    %v806 = vunpack.c.h.b16 %v195
    %v807 = vunpack.c.l.b16 %v196
    %v808 = vunpack.c.h.b16 %v196
    %v809 = vunpack.c.l.b16 %v197
    %v810 = vunpack.c.h.b16 %v197
    %v811 = vunpack.c.l.b16 %v198
    %v812 = vunpack.c.h.b16 %v198
    %v813 = vunpack.c.l.b16 %v199
    %v814 = vunpack.c.h.b16 %v199
    %v815 = vunpack.c.l.b16 %v200
    %v816 = vunpack.c.h.b16 %v200
    %v817 = vunpack.c.l.b16 %v201
    %v818 = vunpack.c.h.b16 %v201
    %v819 = vunpack.c.l.b16 %v202
    %v820 = vunpack.c.h.b16 %v202
    %v821 = vunpack.c.l.b16 %v203
    %v822 = vunpack.c.h.b16 %v203
    %v823 = vunpack.c.l.b16 %v204
    %v824 = vunpack.c.h.b16 %v204
    %v825 = vunpack.c.l.b16 %v205
    %v826 = vunpack.c.h.b16 %v205
    %v827 = vunpack.c.l.b16 %v206
    %v828 = vunpack.c.h.b16 %v206
    %v829 = vunpack.c.l.b16 %v207
    %v830 = vunpack.c.h.b16 %v207
    %v831 = vunpack.c.l.b16 %v208
    %v832 = vunpack.c.h.b16 %v208
    %v833 = vunpack.c.l.b16 %v209
    %v834 = vunpack.c.h.b16 %v209
    %v835 = vunpack.c.l.b16 %v210
    %v836 = vunpack.c.h.b16 %v210
    %v837 = vunpack.c.l.b16 %v211
    %v838 = vunpack.c.h.b16 %v211
    %v839 = vunpack.c.l.b16 %v212
    %v840 = vunpack.c.h.b16 %v212
    %v841 = vunpack.c.l.b16 %v213
    %v842 = vunpack.c.h.b16 %v213
    %v843 = vunpack.c.l.b16 %v214
    %v844 = vunpack.c.h.b16 %v214
    %v845 = vunpack.c.l.b16 %v215
    %v846 = vunpack.c.h.b16 %v215
    %v847 = vunpack.c.l.b16 %v216
    %v848 = vunpack.c.h.b16 %v216
    %v849 = vunpack.c.l.b16 %v217
    %v850 = vunpack.c.h.b16 %v217
    %v851 = vunpack.c.l.b16 %v218
    %v852 = vunpack.c.h.b16 %v218
    %v853 = vunpack.c.l.b16 %v219
    %v854 = vunpack.c.h.b16 %v219
    %v855 = vunpack.c.l.b16 %v220
    %v856 = vunpack.c.h.b16 %v220
    %v857 = vunpack.c.l.b16 %v221
    %v858 = vunpack.c.h.b16 %v221
    %v859 = vunpack.c.l.b16 %v222
    %v860 = vunpack.c.h.b16 %v222
    %v861 = vunpack.c.l.b16 %v223
    %v862 = vunpack.c.h.b16 %v223
    %v863 = vunpack.c.l.b16 %v224
    %v864 = vunpack.c.h.b16 %v224
    %v865 = vunpack.c.l.b16 %v225
    %v866 = vunpack.c.h.b16 %v225
    %v867 = vunpack.c.l.b16 %v226
    %v868 = vunpack.c.h.b16 %v226
    %v869 = vunpack.c.l.b16 %v227
    %v870 = vunpack.c.h.b16 %v227
    %v871 = vunpack.c.l.b16 %v228
    %v872 = vunpack.c.h.b16 %v228
    %v873 = vunpack.c.l.b16 %v229
    %v874 = vunpack.c.h.b16 %v229
    %v875 = vunpack.c.l.b16 %v230
    %v876 = vunpack.c.h.b16 %v230
    %v877 = vunpack.c.l.b16 %v231
    %v878 = vunpack.c.h.b16 %v231
    %v879 = vunpack.c.l.b16 %v232
    %v880 = vunpack.c.h.b16 %v232
    %v881 = vunpack.c.l.b16 %v233
    %v882 = vunpack.c.h.b16 %v233
    %v883 = vunpack.c.l.b16 %v234
    %v884 = vunpack.c.h.b16 %v234
    %v885 = vunpack.c.l.b16 %v235
    %v886 = vunpack.c.h.b16 %v235
    %v887 = vunpack.c.l.b16 %v236
    %v888 = vunpack.c.h.b16 %v236
    %v889 = vunpack.c.l.b16 %v237
    %v890 = vunpack.c.h.b16 %v237
    %v891 = vunpack.c.l.b16 %v238
    %v892 = vunpack.c.h.b16 %v238
    %v893 = vunpack.c.l.b16 %v239
    %v894 = vunpack.c.h.b16 %v239
    %v895 = vunpack.c.l.b16 %v240
    %v896 = vunpack.c.h.b16 %v240
    %v897 = vunpack.c.l.b16 %v241
    %v898 = vunpack.c.h.b16 %v241
    %v899 = vunpack.c.l.b16 %v242
    %v900 = vunpack.c.h.b16 %v242
    %v901 = vunpack.c.l.b16 %v243
    %v902 = vunpack.c.h.b16 %v243
    %v903 = vunpack.c.l.b16 %v244
    %v904 = vunpack.c.h.b16 %v244
    %v905 = vunpack.c.l.b16 %v245
    %v906 = vunpack.c.h.b16 %v245
    %v907 = vunpack.c.l.b16 %v246
    %v908 = vunpack.c.h.b16 %v246
    %v909 = vunpack.c.l.b16 %v247
    %v910 = vunpack.c.h.b16 %v247
    %v911 = vunpack.c.l.b16 %v248
    %v912 = vunpack.c.h.b16 %v248
    %v913 = vunpack.c.l.b16 %v249
    %v914 = vunpack.c.h.b16 %v249
    %v915 = vunpack.c.l.b16 %v250
    %v916 = vunpack.c.h.b16 %v250
    %v917 = vunpack.c.l.b16 %v251
    %v918 = vunpack.c.h.b16 %v251
    %v919 = vunpack.c.l.b16 %v252
    %v920 = vunpack.c.h.b16 %v252
    %v921 = vunpack.c.l.b16 %v253
    %v922 = vunpack.c.h.b16 %v253
    %v923 = vunpack.c.l.b16 %v254
    %v924 = vunpack.c.h.b16 %v254
    %v925 = vunpack.c.l.b16 %v255
    %v926 = vunpack.c.h.b16 %v255
    %v927 = vunpack.c.l.b16 %v256
    %v928 = vunpack.c.h.b16 %v256
    %v929 = vunpack.c.l.b16 %v257
    %v930 = vunpack.c.h.b16 %v257
    %v931 = vunpack.c.l.b16 %v258
    %v932 = vunpack.c.h.b16 %v258
    %v933 = vunpack.c.l.b16 %v259
    %v934 = vunpack.c.h.b16 %v259
    %v935 = vunpack.c.l.b16 %v260
    %v936 = vunpack.c.h.b16 %v260
    %v937 = vunpack.c.l.b16 %v261
    %v938 = vunpack.c.h.b16 %v261
    %v939 = vunpack.c.l.b16 %v262
    %v940 = vunpack.c.h.b16 %v262
    %v941 = vunpack.c.l.b16 %v263
    %v942 = vunpack.c.h.b16 %v263
    %v943 = vunpack.c.l.b16 %v264
    %v944 = vunpack.c.h.b16 %v264
    %v945 = vunpack.c.l.b16 %v265
    %v946 = vunpack.c.h.b16 %v265
    %v947 = vunpack.c.l.b16 %v266
    %v948 = vunpack.c.h.b16 %v266
    %v949 = vunpack.c.l.b16 %v267
    %v950 = vunpack.c.h.b16 %v267
    %v951 = vunpack.c.l.b16 %v268
    %v952 = vunpack.c.h.b16 %v268
    %v953 = vunpack.c.l.b16 %v269
    %v954 = vunpack.c.h.b16 %v269
    %v955 = vunpack.c.l.b16 %v270
    %v956 = vunpack.c.h.b16 %v270
    %v957 = vunpack.c.l.b16 %v271
    %v958 = vunpack.c.h.b16 %v271
    %v959 = vunpack.c.l.b16 %v272
    %v960 = vunpack.c.h.b16 %v272
    %v961 = vunpack.c.l.b16 %v273
    %v962 = vunpack.c.h.b16 %v273
    %v963 = vunpack.c.l.b16 %v274
    %v964 = vunpack.c.h.b16 %v274
    %v965 = vunpack.c.l.b16 %v275
    %v966 = vunpack.c.h.b16 %v275
    %v967 = vunpack.c.l.b16 %v276
    %v968 = vunpack.c.h.b16 %v276
    %v969 = vunpack.c.l.b16 %v277
    %v970 = vunpack.c.h.b16 %v277
    %v971 = vunpack.c.l.b16 %v278
    %v972 = vunpack.c.h.b16 %v278
    %v973 = vunpack.c.l.b16 %v279
    %v974 = vunpack.c.h.b16 %v279
    %v975 = vunpack.c.l.b16 %v280
    %v976 = vunpack.c.h.b16 %v280
    %v977 = vunpack.c.l.b16 %v281
    %v978 = vunpack.c.h.b16 %v281
    %v979 = vunpack.c.l.b16 %v282
    %v980 = vunpack.c.h.b16 %v282
    %v981 = vunpack.c.l.b16 %v283
    %v982 = vunpack.c.h.b16 %v283
    %v983 = vunpack.c.l.b16 %v284
    %v984 = vunpack.c.h.b16 %v284
    %v985 = vunpack.c.l.b16 %v285
    %v986 = vunpack.c.h.b16 %v285
    %v987 = vunpack.c.l.b16 %v286
    %v988 = vunpack.c.h.b16 %v286
    %v989 = vunpack.c.l.b16 %v287
    %v990 = vunpack.c.h.b16 %v287
    %v991 = vunpack.c.l.b16 %v288
    %v992 = vunpack.c.h.b16 %v288
    %v993 = vunpack.c.l.b16 %v289
    %v994 = vunpack.c.h.b16 %v289
    %v995 = vunpack.c.l.b16 %v290
    %v996 = vunpack.c.h.b16 %v290
    %v997 = vunpack.c.l.b16 %v291
    %v998 = vunpack.c.h.b16 %v291
    %v999 = vunpack.c.l.b16 %v292
    %v1000 = vunpack.c.h.b16 %v292
    %v1001 = vunpack.c.l.b16 %v293
    %v1002 = vunpack.c.h.b16 %v293
    %v1003 = vunpack.c.l.b16 %v294
    %v1004 = vunpack.c.h.b16 %v294
    %v1005 = vunpack.c.l.b16 %v295
    %v1006 = vunpack.c.h.b16 %v295
    %v1007 = vunpack.c.l.b16 %v296
    %v1008 = vunpack.c.h.b16 %v296
    %v1009 = vunpack.c.l.b16 %v297
    %v1010 = vunpack.c.h.b16 %v297
    %v1011 = vunpack.c.l.b16 %v298
    %v1012 = vunpack.c.h.b16 %v298
    %v1013 = vunpack.c.l.b16 %v299
    %v1014 = vunpack.c.h.b16 %v299
    %v1015 = vunpack.c.l.b16 %v300
    %v1016 = vunpack.c.h.b16 %v300
    %v1017 = vunpack.c.l.b16 %v301
    %v1018 = vunpack.c.h.b16 %v301
    %v1019 = vunpack.c.l.b16 %v302
    %v1020 = vunpack.c.h.b16 %v302
    %v1021 = vunpack.c.l.b16 %v303
    %v1022 = vunpack.c.h.b16 %v303
    %v1023 = vunpack.c.l.b16 %v304
    %v1024 = vunpack.c.h.b16 %v304
    %v1025 = vunpack.c.l.b16 %v305
    %v1026 = vunpack.c.h.b16 %v305
    %v1027 = vunpack.c.l.b16 %v306
    %v1028 = vunpack.c.h.b16 %v306
    %v1029 = vunpack.c.l.b16 %v307
    %v1030 = vunpack.c.h.b16 %v307
    %v1031 = vunpack.c.l.b16 %v308
    %v1032 = vunpack.c.h.b16 %v308
    %v1033 = vunpack.c.l.b16 %v309
    %v1034 = vunpack.c.h.b16 %v309
    %v1035 = vunpack.c.l.b16 %v310
    %v1036 = vunpack.c.h.b16 %v310
    %v1037 = vunpack.c.l.b16 %v311
    %v1038 = vunpack.c.h.b16 %v311
    %v1039 = vunpack.c.l.b16 %v312
    %v1040 = vunpack.c.h.b16 %v312
    %v1041 = vunpack.c.l.b16 %v313
    %v1042 = vunpack.c.h.b16 %v313
    %v1043 = vunpack.c.l.b16 %v314
    %v1044 = vunpack.c.h.b16 %v314
    %v1045 = vpack.c.b16 %v601, %v597
    %v1046 = vpack.c.b16 %v602, %v598
    %v1047 = vpack.c.b16 %v603, %v599
    %v1048 = vpack.c.b16 %v604, %v600
    %v1049 = vpack.c.b16 %v609, %v605
    %v1050 = vpack.c.b16 %v610, %v606
    %v1051 = vpack.c.b16 %v611, %v607
    %v1052 = vpack.c.b16 %v612, %v608
    %v1053 = vpack.c.b16 %v617, %v613
    %v1054 = vpack.c.b16 %v618, %v614
    %v1055 = vpack.c.b16 %v619, %v615
    %v1056 = vpack.c.b16 %v620, %v616
    %v1057 = vpack.c.b16 %v625, %v621
    %v1058 = vpack.c.b16 %v626, %v622
    %v1059 = vpack.c.b16 %v627, %v623
    %v1060 = vpack.c.b16 %v628, %v624
    %v1061 = vpack.c.b16 %v633, %v629
    %v1062 = vpack.c.b16 %v634, %v630
    %v1063 = vpack.c.b16 %v635, %v631
    %v1064 = vpack.c.b16 %v636, %v632
    %v1065 = vpack.c.b16 %v641, %v637
    %v1066 = vpack.c.b16 %v642, %v638
    %v1067 = vpack.c.b16 %v643, %v639
    %v1068 = vpack.c.b16 %v644, %v640
    %v1069 = vpack.c.b16 %v649, %v645
    %v1070 = vpack.c.b16 %v650, %v646
    %v1071 = vpack.c.b16 %v651, %v647
    %v1072 = vpack.c.b16 %v652, %v648
    %v1073 = vpack.c.b16 %v657, %v653
    %v1074 = vpack.c.b16 %v658, %v654
    %v1075 = vpack.c.b16 %v659, %v655
    %v1076 = vpack.c.b16 %v660, %v656
    %v1077 = vpack.c.b16 %v665, %v661
    %v1078 = vpack.c.b16 %v666, %v662
    %v1079 = vpack.c.b16 %v667, %v663
    %v1080 = vpack.c.b16 %v668, %v664
    %v1081 = vpack.c.b16 %v673, %v669
    %v1082 = vpack.c.b16 %v674, %v670
    %v1083 = vpack.c.b16 %v675, %v671
    %v1084 = vpack.c.b16 %v676, %v672
    %v1085 = vpack.c.b16 %v681, %v677
    %v1086 = vpack.c.b16 %v682, %v678
    %v1087 = vpack.c.b16 %v683, %v679
    %v1088 = vpack.c.b16 %v684, %v680
    %v1089 = vpack.c.b16 %v689, %v685
    %v1090 = vpack.c.b16 %v690, %v686
    %v1091 = vpack.c.b16 %v691, %v687
    %v1092 = vpack.c.b16 %v692, %v688
    %v1093 = vpack.c.b16 %v697, %v693
    %v1094 = vpack.c.b16 %v698, %v694
    %v1095 = vpack.c.b16 %v699, %v695
    %v1096 = vpack.c.b16 %v700, %v696
    %v1097 = vpack.c.b16 %v705, %v701
    %v1098 = vpack.c.b16 %v706, %v702
    %v1099 = vpack.c.b16 %v707, %v703
    %v1100 = vpack.c.b16 %v708, %v704
    %v1101 = vpack.c.b16 %v713, %v709
    %v1102 = vpack.c.b16 %v714, %v710
    %v1103 = vpack.c.b16 %v715, %v711
    %v1104 = vpack.c.b16 %v716, %v712
    %v1105 = vpack.c.b16 %v721, %v717
    %v1106 = vpack.c.b16 %v722, %v718
    %v1107 = vpack.c.b16 %v723, %v719
    %v1108 = vpack.c.b16 %v724, %v720
    %v1109 = vpack.c.b16 %v729, %v725
    %v1110 = vpack.c.b16 %v730, %v726
    %v1111 = vpack.c.b16 %v731, %v727
    %v1112 = vpack.c.b16 %v732, %v728
    %v1113 = vpack.c.b16 %v737, %v733
    %v1114 = vpack.c.b16 %v738, %v734
    %v1115 = vpack.c.b16 %v739, %v735
    %v1116 = vpack.c.b16 %v740, %v736
    %v1117 = vpack.c.b16 %v745, %v741
    %v1118 = vpack.c.b16 %v746, %v742
    %v1119 = vpack.c.b16 %v747, %v743
    %v1120 = vpack.c.b16 %v748, %v744
    %v1121 = vpack.c.b16 %v753, %v749
    %v1122 = vpack.c.b16 %v754, %v750
    %v1123 = vpack.c.b16 %v755, %v751
    %v1124 = vpack.c.b16 %v756, %v752
    %v1125 = vpack.c.b16 %v761, %v757
    %v1126 = vpack.c.b16 %v762, %v758
    %v1127 = vpack.c.b16 %v763, %v759
    %v1128 = vpack.c.b16 %v764, %v760
    %v1129 = vpack.c.b16 %v769, %v765
    %v1130 = vpack.c.b16 %v770, %v766
    %v1131 = vpack.c.b16 %v771, %v767
    %v1132 = vpack.c.b16 %v772, %v768
    %v1133 = vpack.c.b16 %v777, %v773
    %v1134 = vpack.c.b16 %v778, %v774
    %v1135 = vpack.c.b16 %v779, %v775
    %v1136 = vpack.c.b16 %v780, %v776
    %v1137 = vpack.c.b16 %v785, %v781
    %v1138 = vpack.c.b16 %v786, %v782
    %v1139 = vpack.c.b16 %v787, %v783
    %v1140 = vpack.c.b16 %v788, %v784
    %v1141 = vpack.c.b16 %v793, %v789
    %v1142 = vpack.c.b16 %v794, %v790
    %v1143 = vpack.c.b16 %v795, %v791
    %v1144 = vpack.c.b16 %v796, %v792
    %v1145 = vpack.c.b16 %v801, %v797
    %v1146 = vpack.c.b16 %v802, %v798
    %v1147 = vpack.c.b16 %v803, %v799
    %v1148 = vpack.c.b16 %v804, %v800
    %v1149 = vpack.c.b16 %v809, %v805
    %v1150 = vpack.c.b16 %v810, %v806
    %v1151 = vpack.c.b16 %v811, %v807
    %v1152 = vpack.c.b16 %v812, %v808
    %v1153 = vpack.c.b16 %v817, %v813
    %v1154 = vpack.c.b16 %v818, %v814
    %v1155 = vpack.c.b16 %v819, %v815
    %v1156 = vpack.c.b16 %v820, %v816
    %v1157 = vpack.c.b16 %v825, %v821
    %v1158 = vpack.c.b16 %v826, %v822
    %v1159 = vpack.c.b16 %v827, %v823
    %v1160 = vpack.c.b16 %v828, %v824
    %v1161 = vpack.c.b16 %v833, %v829
    %v1162 = vpack.c.b16 %v834, %v830
    %v1163 = vpack.c.b16 %v835, %v831
    %v1164 = vpack.c.b16 %v836, %v832
    %v1165 = vpack.c.b16 %v841, %v837
    %v1166 = vpack.c.b16 %v842, %v838
    %v1167 = vpack.c.b16 %v843, %v839
    %v1168 = vpack.c.b16 %v844, %v840
    %v1169 = vpack.c.b16 %v849, %v845
    %v1170 = vpack.c.b16 %v850, %v846
    %v1171 = vpack.c.b16 %v851, %v847
    %v1172 = vpack.c.b16 %v852, %v848
    %v1173 = vpack.c.b16 %v857, %v853
    %v1174 = vpack.c.b16 %v858, %v854
    %v1175 = vpack.c.b16 %v859, %v855
    %v1176 = vpack.c.b16 %v860, %v856
    %v1177 = vpack.c.b16 %v865, %v861
    %v1178 = vpack.c.b16 %v866, %v862
    %v1179 = vpack.c.b16 %v867, %v863
    %v1180 = vpack.c.b16 %v868, %v864
    %v1181 = vpack.c.b16 %v873, %v869
    %v1182 = vpack.c.b16 %v874, %v870
    %v1183 = vpack.c.b16 %v875, %v871
    %v1184 = vpack.c.b16 %v876, %v872
    %v1185 = vpack.c.b16 %v881, %v877
    %v1186 = vpack.c.b16 %v882, %v878
    %v1187 = vpack.c.b16 %v883, %v879
    %v1188 = vpack.c.b16 %v884, %v880
    %v1189 = vpack.c.b16 %v889, %v885
    %v1190 = vpack.c.b16 %v890, %v886
    %v1191 = vpack.c.b16 %v891, %v887
    %v1192 = vpack.c.b16 %v892, %v888
    %v1193 = vpack.c.b16 %v897, %v893
    %v1194 = vpack.c.b16 %v898, %v894
    %v1195 = vpack.c.b16 %v899, %v895
    %v1196 = vpack.c.b16 %v900, %v896
    %v1197 = vpack.c.b16 %v905, %v901
    %v1198 = vpack.c.b16 %v906, %v902
    %v1199 = vpack.c.b16 %v907, %v903
    %v1200 = vpack.c.b16 %v908, %v904
    %v1201 = vpack.c.b16 %v913, %v909
    %v1202 = vpack.c.b16 %v914, %v910
    %v1203 = vpack.c.b16 %v915, %v911
    %v1204 = vpack.c.b16 %v916, %v912
    %v1205 = vpack.c.b16 %v921, %v917
    %v1206 = vpack.c.b16 %v922, %v918
    %v1207 = vpack.c.b16 %v923, %v919
    %v1208 = vpack.c.b16 %v924, %v920
    %v1209 = vpack.c.b16 %v929, %v925
    %v1210 = vpack.c.b16 %v930, %v926
    %v1211 = vpack.c.b16 %v931, %v927
    %v1212 = vpack.c.b16 %v932, %v928
    %v1213 = vpack.c.b16 %v937, %v933
    %v1214 = vpack.c.b16 %v938, %v934
    %v1215 = vpack.c.b16 %v939, %v935
    %v1216 = vpack.c.b16 %v940, %v936
    %v1217 = vpack.c.b16 %v945, %v941
    %v1218 = vpack.c.b16 %v946, %v942
    %v1219 = vpack.c.b16 %v947, %v943
    %v1220 = vpack.c.b16 %v948, %v944
    %v1221 = vpack.c.b16 %v953, %v949
    %v1222 = vpack.c.b16 %v954, %v950
    %v1223 = vpack.c.b16 %v955, %v951
    %v1224 = vpack.c.b16 %v956, %v952
    %v1225 = vpack.c.b16 %v961, %v957
    %v1226 = vpack.c.b16 %v962, %v958
    %v1227 = vpack.c.b16 %v963, %v959
    %v1228 = vpack.c.b16 %v964, %v960
    %v1229 = vpack.c.b16 %v969, %v965
    %v1230 = vpack.c.b16 %v970, %v966
    %v1231 = vpack.c.b16 %v971, %v967
    %v1232 = vpack.c.b16 %v972, %v968
    %v1233 = vpack.c.b16 %v977, %v973
    %v1234 = vpack.c.b16 %v978, %v974
    %v1235 = vpack.c.b16 %v979, %v975
    %v1236 = vpack.c.b16 %v980, %v976
    %v1237 = vpack.c.b16 %v985, %v981
    %v1238 = vpack.c.b16 %v986, %v982
    %v1239 = vpack.c.b16 %v987, %v983
    %v1240 = vpack.c.b16 %v988, %v984
    %v1241 = vpack.c.b16 %v993, %v989
    %v1242 = vpack.c.b16 %v994, %v990
    %v1243 = vpack.c.b16 %v995, %v991
    %v1244 = vpack.c.b16 %v996, %v992
    %v1245 = vpack.c.b16 %v1001, %v997
    %v1246 = vpack.c.b16 %v1002, %v998
    %v1247 = vpack.c.b16 %v1003, %v999
    %v1248 = vpack.c.b16 %v1004, %v1000
    %v1249 = vpack.c.b16 %v1009, %v1005
    %v1250 = vpack.c.b16 %v1010, %v1006
    %v1251 = vpack.c.b16 %v1011, %v1007
    %v1252 = vpack.c.b16 %v1012, %v1008
    %v1253 = vpack.c.b16 %v1017, %v1013
    %v1254 = vpack.c.b16 %v1018, %v1014
    %v1255 = vpack.c.b16 %v1019, %v1015
    %v1256 = vpack.c.b16 %v1020, %v1016
    %v1257 = vpack.c.b16 %v1025, %v1021
    %v1258 = vpack.c.b16 %v1026, %v1022
    %v1259 = vpack.c.b16 %v1027, %v1023
    %v1260 = vpack.c.b16 %v1028, %v1024
    %v1261 = vpack.c.b16 %v1033, %v1029
    %v1262 = vpack.c.b16 %v1034, %v1030
    %v1263 = vpack.c.b16 %v1035, %v1031
    %v1264 = vpack.c.b16 %v1036, %v1032
    %v1265 = vpack.c.b16 %v1041, %v1037
    %v1266 = vpack.c.b16 %v1042, %v1038
    %v1267 = vpack.c.b16 %v1043, %v1039
    %v1268 = vpack.c.b16 %v1044, %v1040
    %1493 = vmatprep.subr.bf16.mxu0 %v1046
    %1494 = vmatpush1.bf16.msra.mxu0 %v1045
    %1495 = vmatprep.subr.bf16.mxu0 %v1050
    %1496 = vmatpush1.bf16.msra.mxu0 %v1049
    %1497 = vmatprep.subr.bf16.mxu0 %v1054
    %1498 = vmatpush1.bf16.msra.mxu0 %v1053
    %1499 = vmatprep.subr.bf16.mxu0 %v1058
    %1500 = vmatpush1.bf16.msra.mxu0 %v1057
    %1501 = vmatprep.subr.bf16.mxu0 %v1062
    %1502 = vmatpush1.bf16.msra.mxu0 %v1061
    %1503 = vmatprep.subr.bf16.mxu0 %v1066
    %1504 = vmatpush1.bf16.msra.mxu0 %v1065
    %1505 = vmatprep.subr.bf16.mxu0 %v1070
    %1506 = vmatpush1.bf16.msra.mxu0 %v1069
    %1507 = vmatprep.subr.bf16.mxu0 %v1074
    %1508 = vmatpush1.bf16.msra.mxu0 %v1073
    %1509 = vmatprep.subr.bf16.mxu0 %v1078
    %1510 = vmatpush1.bf16.msra.mxu0 %v1077
    %1511 = vmatprep.subr.bf16.mxu0 %v1082
    %1512 = vmatpush1.bf16.msra.mxu0 %v1081
    %1513 = vmatprep.subr.bf16.mxu0 %v1086
    %1514 = vmatpush1.bf16.msra.mxu0 %v1085
    %1515 = vmatprep.subr.bf16.mxu0 %v1090
    %1516 = vmatpush1.bf16.msra.mxu0 %v1089
    %1517 = vmatprep.subr.bf16.mxu0 %v1094
    %1518 = vmatpush1.bf16.msra.mxu0 %v1093
    %1519 = vmatprep.subr.bf16.mxu0 %v1098
    %1520 = vmatpush1.bf16.msra.mxu0 %v1097
    %1521 = vmatprep.subr.bf16.mxu0 %v1102
    %1522 = vmatpush1.bf16.msra.mxu0 %v1101
    %1523 = vmatprep.subr.bf16.mxu0 %v1106
    %1524 = vmatpush1.bf16.msra.mxu0 %v1105
    %1525 = vmatprep.mubr.bf16.mxu0 %v360
    %1526 = vmatmul.mubr.bf16.gmra.mrb[0].mxu0 %v359
    %v1527 = vpop.f32.mrb[0].mxu0
    %v1528 = vadd.f32 %v320, %v1527
    %v1529 = vpop.f32.mrb[0].mxu0
    %v1530 = vadd.f32 %v324, %v1529
    %v1531 = vpop.f32.mrb[0].mxu0
    %v1532 = vadd.f32 %v320, %v1531
    %v1533 = vpop.f32.mrb[0].mxu0
    %v1534 = vadd.f32 %v324, %v1533
    %1535 = vdwg.mxu0
    %1536 = vmatprep.subr.bf16.mxu0 %v1110
    %1537 = vmatpush1.bf16.msra.mxu0 %v1109
    %1538 = vmatprep.subr.bf16.mxu0 %v1114
    %1539 = vmatpush1.bf16.msra.mxu0 %v1113
    %1540 = vmatprep.subr.bf16.mxu0 %v1118
    %1541 = vmatpush1.bf16.msra.mxu0 %v1117
    %1542 = vmatprep.subr.bf16.mxu0 %v1122
    %1543 = vmatpush1.bf16.msra.mxu0 %v1121
    %1544 = vmatprep.subr.bf16.mxu0 %v1126
    %1545 = vmatpush1.bf16.msra.mxu0 %v1125
    %1546 = vmatprep.subr.bf16.mxu0 %v1130
    %1547 = vmatpush1.bf16.msra.mxu0 %v1129
    %1548 = vmatprep.subr.bf16.mxu0 %v1134
    %1549 = vmatpush1.bf16.msra.mxu0 %v1133
    %1550 = vmatprep.subr.bf16.mxu0 %v1138
    %1551 = vmatpush1.bf16.msra.mxu0 %v1137
    %1552 = vmatprep.subr.bf16.mxu0 %v1142
    %1553 = vmatpush1.bf16.msra.mxu0 %v1141
    %1554 = vmatprep.subr.bf16.mxu0 %v1146
    %1555 = vmatpush1.bf16.msra.mxu0 %v1145
    %1556 = vmatprep.subr.bf16.mxu0 %v1150
    %1557 = vmatpush1.bf16.msra.mxu0 %v1149
    %1558 = vmatprep.subr.bf16.mxu0 %v1154
    %1559 = vmatpush1.bf16.msra.mxu0 %v1153
    %1560 = vmatprep.subr.bf16.mxu0 %v1158
    %1561 = vmatpush1.bf16.msra.mxu0 %v1157
    %1562 = vmatprep.subr.bf16.mxu0 %v1162
    %1563 = vmatpush1.bf16.msra.mxu0 %v1161
    %1564 = vmatprep.subr.bf16.mxu0 %v1166
    %1565 = vmatpush1.bf16.msra.mxu0 %v1165
    %1566 = vmatprep.subr.bf16.mxu0 %v1170
    %1567 = vmatpush1.bf16.msra.mxu0 %v1169
    %1568 = vmatprep.mubr.bf16.mxu0 %v362
    %1569 = vmatmul.mubr.bf16.gmra.mrb[0].mxu0 %v361
    %v1570 = vpop.f32.mrb[0].mxu0
    %v1571 = vadd.f32 %v1528, %v1570
    %v1572 = vpop.f32.mrb[0].mxu0
    %v1573 = vadd.f32 %v1530, %v1572
    %v1574 = vpop.f32.mrb[0].mxu0
    %v1575 = vadd.f32 %v1532, %v1574
    %v1576 = vpop.f32.mrb[0].mxu0
    %v1577 = vadd.f32 %v1534, %v1576
    %1578 = vdwg.mxu0
    %1579 = vmatprep.subr.bf16.mxu0 %v1174
    %1580 = vmatpush1.bf16.msra.mxu0 %v1173
    %1581 = vmatprep.subr.bf16.mxu0 %v1178
    %1582 = vmatpush1.bf16.msra.mxu0 %v1177
    %1583 = vmatprep.subr.bf16.mxu0 %v1182
    %1584 = vmatpush1.bf16.msra.mxu0 %v1181
    %1585 = vmatprep.subr.bf16.mxu0 %v1186
    %1586 = vmatpush1.bf16.msra.mxu0 %v1185
    %1587 = vmatprep.subr.bf16.mxu0 %v1190
    %1588 = vmatpush1.bf16.msra.mxu0 %v1189
    %1589 = vmatprep.subr.bf16.mxu0 %v1194
    %1590 = vmatpush1.bf16.msra.mxu0 %v1193
    %1591 = vmatprep.subr.bf16.mxu0 %v1198
    %1592 = vmatpush1.bf16.msra.mxu0 %v1197
    %1593 = vmatprep.subr.bf16.mxu0 %v1202
    %1594 = vmatpush1.bf16.msra.mxu0 %v1201
    %1595 = vmatprep.subr.bf16.mxu0 %v1206
    %1596 = vmatpush1.bf16.msra.mxu0 %v1205
    %1597 = vmatprep.subr.bf16.mxu0 %v1210
    %1598 = vmatpush1.bf16.msra.mxu0 %v1209
    %1599 = vmatprep.subr.bf16.mxu0 %v1214
    %1600 = vmatpush1.bf16.msra.mxu0 %v1213
    %1601 = vmatprep.subr.bf16.mxu0 %v1218
    %1602 = vmatpush1.bf16.msra.mxu0 %v1217
    %1603 = vmatprep.subr.bf16.mxu0 %v1222
    %1604 = vmatpush1.bf16.msra.mxu0 %v1221
    %1605 = vmatprep.subr.bf16.mxu0 %v1226
    %1606 = vmatpush1.bf16.msra.mxu0 %v1225
    %1607 = vmatprep.subr.bf16.mxu0 %v1230
    %1608 = vmatpush1.bf16.msra.mxu0 %v1229
    %1609 = vmatprep.subr.bf16.mxu0 %v1234
    %1610 = vmatpush1.bf16.msra.mxu0 %v1233
    %1611 = vmatprep.mubr.bf16.mxu0 %v364
    %1612 = vmatmul.mubr.bf16.gmra.mrb[0].mxu0 %v363
    %v1613 = vpop.f32.mrb[0].mxu0
    %v1614 = vadd.f32 %v1571, %v1613
    %v1615 = vpop.f32.mrb[0].mxu0
    %v1616 = vadd.f32 %v1573, %v1615
    %v1617 = vpop.f32.mrb[0].mxu0
    %v1618 = vadd.f32 %v1575, %v1617
    %v1619 = vpop.f32.mrb[0].mxu0
    %v1620 = vadd.f32 %v1577, %v1619
    %1621 = vdwg.mxu0
    %1622 = vmatprep.subr.bf16.mxu0 %v1238
    %1623 = vmatpush1.bf16.msra.mxu0 %v1237
    %1624 = vmatprep.subr.bf16.mxu0 %v1242
    %1625 = vmatpush1.bf16.msra.mxu0 %v1241
    %1626 = vmatprep.subr.bf16.mxu0 %v1246
    %1627 = vmatpush1.bf16.msra.mxu0 %v1245
    %1628 = vmatprep.subr.bf16.mxu0 %v1250
    %1629 = vmatpush1.bf16.msra.mxu0 %v1249
    %1630 = vmatprep.subr.bf16.mxu0 %v1254
    %1631 = vmatpush1.bf16.msra.mxu0 %v1253
    %1632 = vmatprep.subr.bf16.mxu0 %v1258
    %1633 = vmatpush1.bf16.msra.mxu0 %v1257
    %1634 = vmatprep.subr.bf16.mxu0 %v1262
    %1635 = vmatpush1.bf16.msra.mxu0 %v1261
    %1636 = vmatprep.subr.bf16.mxu0 %v1266
    %1637 = vmatpush1.bf16.msra.mxu0 %v1265
    %1638 = vmatprep.subr.bf16.mxu0 0
    %1639 = vmatpush1.bf16.msra.mxu0 0
    %1640 = vmatprep.subr.bf16.mxu0 0
    %1641 = vmatpush1.bf16.msra.mxu0 0
    %1642 = vmatprep.subr.bf16.mxu0 0
    %1643 = vmatpush1.bf16.msra.mxu0 0
    %1644 = vmatprep.subr.bf16.mxu0 0
    %1645 = vmatpush1.bf16.msra.mxu0 0
    %1646 = vmatprep.subr.bf16.mxu0 0
    %1647 = vmatpush1.bf16.msra.mxu0 0
    %1648 = vmatprep.subr.bf16.mxu0 0
    %1649 = vmatpush1.bf16.msra.mxu0 0
    %1650 = vmatprep.subr.bf16.mxu0 0
    %1651 = vmatpush1.bf16.msra.mxu0 0
    %1652 = vmatprep.subr.bf16.mxu0 0
    %1653 = vmatpush1.bf16.msra.mxu0 0
    %1654 = vmatprep.mubr.bf16.mxu0 0
    %1655 = vmatmul.mubr.bf16.gmra.mrb[0].mxu0 %v365
    %v1656 = vpop.f32.mrb[0].mxu0
    %v1657 = vadd.f32 %v1614, %v1656
    %v1658 = vpop.f32.mrb[0].mxu0
    %v1659 = vadd.f32 %v1616, %v1658
    %v1660 = vpop.f32.mrb[0].mxu0
    %v1661 = vadd.f32 %v1618, %v1660
    %v1662 = vpop.f32.mrb[0].mxu0
    %v1663 = vadd.f32 %v1620, %v1662
    %1664 = vdwg.mxu0
    %1665 = vmatprep.subr.bf16.mxu0 %v1048
    %1666 = vmatpush1.bf16.msra.mxu0 %v1047
    %1667 = vmatprep.subr.bf16.mxu0 %v1052
    %1668 = vmatpush1.bf16.msra.mxu0 %v1051
    %1669 = vmatprep.subr.bf16.mxu0 %v1056
    %1670 = vmatpush1.bf16.msra.mxu0 %v1055
    %1671 = vmatprep.subr.bf16.mxu0 %v1060
    %1672 = vmatpush1.bf16.msra.mxu0 %v1059
    %1673 = vmatprep.subr.bf16.mxu0 %v1064
    %1674 = vmatpush1.bf16.msra.mxu0 %v1063
    %1675 = vmatprep.subr.bf16.mxu0 %v1068
    %1676 = vmatpush1.bf16.msra.mxu0 %v1067
    %1677 = vmatprep.subr.bf16.mxu0 %v1072
    %1678 = vmatpush1.bf16.msra.mxu0 %v1071
    %1679 = vmatprep.subr.bf16.mxu0 %v1076
    %1680 = vmatpush1.bf16.msra.mxu0 %v1075
    %1681 = vmatprep.subr.bf16.mxu0 %v1080
    %1682 = vmatpush1.bf16.msra.mxu0 %v1079
    %1683 = vmatprep.subr.bf16.mxu0 %v1084
    %1684 = vmatpush1.bf16.msra.mxu0 %v1083
    %1685 = vmatprep.subr.bf16.mxu0 %v1088
    %1686 = vmatpush1.bf16.msra.mxu0 %v1087
    %1687 = vmatprep.subr.bf16.mxu0 %v1092
    %1688 = vmatpush1.bf16.msra.mxu0 %v1091
    %1689 = vmatprep.subr.bf16.mxu0 %v1096
    %1690 = vmatpush1.bf16.msra.mxu0 %v1095
    %1691 = vmatprep.subr.bf16.mxu0 %v1100
    %1692 = vmatpush1.bf16.msra.mxu0 %v1099
    %1693 = vmatprep.subr.bf16.mxu0 %v1104
    %1694 = vmatpush1.bf16.msra.mxu0 %v1103
    %1695 = vmatprep.subr.bf16.mxu0 %v1108
    %1696 = vmatpush1.bf16.msra.mxu0 %v1107
    %1697 = vmatprep.mubr.bf16.mxu0 %v360
    %1698 = vmatmul.mubr.bf16.gmra.mrb[0].mxu0 %v359
    %v1699 = vpop.f32.mrb[0].mxu0
    %v1700 = vadd.f32 %v328, %v1699
    %v1701 = vpop.f32.mrb[0].mxu0
    %v1702 = vadd.f32 %v332, %v1701
    %v1703 = vpop.f32.mrb[0].mxu0
    %v1704 = vadd.f32 %v328, %v1703
    %v1705 = vpop.f32.mrb[0].mxu0
    %v1706 = vadd.f32 %v332, %v1705
    %1707 = vdwg.mxu0
    %1708 = vmatprep.subr.bf16.mxu0 %v1112
    %1709 = vmatpush1.bf16.msra.mxu0 %v1111
    %1710 = vmatprep.subr.bf16.mxu0 %v1116
    %1711 = vmatpush1.bf16.msra.mxu0 %v1115
    %1712 = vmatprep.subr.bf16.mxu0 %v1120
    %1713 = vmatpush1.bf16.msra.mxu0 %v1119
    %1714 = vmatprep.subr.bf16.mxu0 %v1124
    %1715 = vmatpush1.bf16.msra.mxu0 %v1123
    %1716 = vmatprep.subr.bf16.mxu0 %v1128
    %1717 = vmatpush1.bf16.msra.mxu0 %v1127
    %1718 = vmatprep.subr.bf16.mxu0 %v1132
    %1719 = vmatpush1.bf16.msra.mxu0 %v1131
    %1720 = vmatprep.subr.bf16.mxu0 %v1136
    %1721 = vmatpush1.bf16.msra.mxu0 %v1135
    %1722 = vmatprep.subr.bf16.mxu0 %v1140
    %1723 = vmatpush1.bf16.msra.mxu0 %v1139
    %1724 = vmatprep.subr.bf16.mxu0 %v1144
    %1725 = vmatpush1.bf16.msra.mxu0 %v1143
    %1726 = vmatprep.subr.bf16.mxu0 %v1148
    %1727 = vmatpush1.bf16.msra.mxu0 %v1147
    %1728 = vmatprep.subr.bf16.mxu0 %v1152
    %1729 = vmatpush1.bf16.msra.mxu0 %v1151
    %1730 = vmatprep.subr.bf16.mxu0 %v1156
    %1731 = vmatpush1.bf16.msra.mxu0 %v1155
    %1732 = vmatprep.subr.bf16.mxu0 %v1160
    %1733 = vmatpush1.bf16.msra.mxu0 %v1159
    %1734 = vmatprep.subr.bf16.mxu0 %v1164
    %1735 = vmatpush1.bf16.msra.mxu0 %v1163
    %1736 = vmatprep.subr.bf16.mxu0 %v1168
    %1737 = vmatpush1.bf16.msra.mxu0 %v1167
    %1738 = vmatprep.subr.bf16.mxu0 %v1172
    %1739 = vmatpush1.bf16.msra.mxu0 %v1171
    %1740 = vmatprep.mubr.bf16.mxu0 %v362
    %1741 = vmatmul.mubr.bf16.gmra.mrb[0].mxu0 %v361
    %v1742 = vpop.f32.mrb[0].mxu0
    %v1743 = vadd.f32 %v1700, %v1742
    %v1744 = vpop.f32.mrb[0].mxu0
    %v1745 = vadd.f32 %v1702, %v1744
    %v1746 = vpop.f32.mrb[0].mxu0
    %v1747 = vadd.f32 %v1704, %v1746
    %v1748 = vpop.f32.mrb[0].mxu0
    %v1749 = vadd.f32 %v1706, %v1748
    %1750 = vdwg.mxu0
    %1751 = vmatprep.subr.bf16.mxu0 %v1176
    %1752 = vmatpush1.bf16.msra.mxu0 %v1175
    %1753 = vmatprep.subr.bf16.mxu0 %v1180
    %1754 = vmatpush1.bf16.msra.mxu0 %v1179
    %1755 = vmatprep.subr.bf16.mxu0 %v1184
    %1756 = vmatpush1.bf16.msra.mxu0 %v1183
    %1757 = vmatprep.subr.bf16.mxu0 %v1188
    %1758 = vmatpush1.bf16.msra.mxu0 %v1187
    %1759 = vmatprep.subr.bf16.mxu0 %v1192
    %1760 = vmatpush1.bf16.msra.mxu0 %v1191
    %1761 = vmatprep.subr.bf16.mxu0 %v1196
    %1762 = vmatpush1.bf16.msra.mxu0 %v1195
    %1763 = vmatprep.subr.bf16.mxu0 %v1200
    %1764 = vmatpush1.bf16.msra.mxu0 %v1199
    %1765 = vmatprep.subr.bf16.mxu0 %v1204
    %1766 = vmatpush1.bf16.msra.mxu0 %v1203
    %1767 = vmatprep.subr.bf16.mxu0 %v1208
    %1768 = vmatpush1.bf16.msra.mxu0 %v1207
    %1769 = vmatprep.subr.bf16.mxu0 %v1212
    %1770 = vmatpush1.bf16.msra.mxu0 %v1211
    %1771 = vmatprep.subr.bf16.mxu0 %v1216
    %1772 = vmatpush1.bf16.msra.mxu0 %v1215
    %1773 = vmatprep.subr.bf16.mxu0 %v1220
    %1774 = vmatpush1.bf16.msra.mxu0 %v1219
    %1775 = vmatprep.subr.bf16.mxu0 %v1224
    %1776 = vmatpush1.bf16.msra.mxu0 %v1223
    %1777 = vmatprep.subr.bf16.mxu0 %v1228
    %1778 = vmatpush1.bf16.msra.mxu0 %v1227
    %1779 = vmatprep.subr.bf16.mxu0 %v1232
    %1780 = vmatpush1.bf16.msra.mxu0 %v1231
    %1781 = vmatprep.subr.bf16.mxu0 %v1236
    %1782 = vmatpush1.bf16.msra.mxu0 %v1235
    %1783 = vmatprep.mubr.bf16.mxu0 %v364
    %1784 = vmatmul.mubr.bf16.gmra.mrb[0].mxu0 %v363
    %v1785 = vpop.f32.mrb[0].mxu0
    %v1786 = vadd.f32 %v1743, %v1785
    %v1787 = vpop.f32.mrb[0].mxu0
    %v1788 = vadd.f32 %v1745, %v1787
    %v1789 = vpop.f32.mrb[0].mxu0
    %v1790 = vadd.f32 %v1747, %v1789
    %v1791 = vpop.f32.mrb[0].mxu0
    %v1792 = vadd.f32 %v1749, %v1791
    %1793 = vdwg.mxu0
    %1794 = vmatprep.subr.bf16.mxu0 %v1240
    %1795 = vmatpush1.bf16.msra.mxu0 %v1239
    %1796 = vmatprep.subr.bf16.mxu0 %v1244
    %1797 = vmatpush1.bf16.msra.mxu0 %v1243
    %1798 = vmatprep.subr.bf16.mxu0 %v1248
    %1799 = vmatpush1.bf16.msra.mxu0 %v1247
    %1800 = vmatprep.subr.bf16.mxu0 %v1252
    %1801 = vmatpush1.bf16.msra.mxu0 %v1251
    %1802 = vmatprep.subr.bf16.mxu0 %v1256
    %1803 = vmatpush1.bf16.msra.mxu0 %v1255
    %1804 = vmatprep.subr.bf16.mxu0 %v1260
    %1805 = vmatpush1.bf16.msra.mxu0 %v1259
    %1806 = vmatprep.subr.bf16.mxu0 %v1264
    %1807 = vmatpush1.bf16.msra.mxu0 %v1263
    %1808 = vmatprep.subr.bf16.mxu0 %v1268
    %1809 = vmatpush1.bf16.msra.mxu0 %v1267
    %1810 = vmatprep.subr.bf16.mxu0 0
    %1811 = vmatpush1.bf16.msra.mxu0 0
    %1812 = vmatprep.subr.bf16.mxu0 0
    %1813 = vmatpush1.bf16.msra.mxu0 0
    %1814 = vmatprep.subr.bf16.mxu0 0
    %1815 = vmatpush1.bf16.msra.mxu0 0
    %1816 = vmatprep.subr.bf16.mxu0 0
    %1817 = vmatpush1.bf16.msra.mxu0 0
    %1818 = vmatprep.subr.bf16.mxu0 0
    %1819 = vmatpush1.bf16.msra.mxu0 0
    %1820 = vmatprep.subr.bf16.mxu0 0
    %1821 = vmatpush1.bf16.msra.mxu0 0
    %1822 = vmatprep.subr.bf16.mxu0 0
    %1823 = vmatpush1.bf16.msra.mxu0 0
    %1824 = vmatprep.subr.bf16.mxu0 0
    %1825 = vmatpush1.bf16.msra.mxu0 0
    %1826 = vmatprep.mubr.bf16.mxu0 0
    %1827 = vmatmul.mubr.bf16.gmra.mrb[0].mxu0 %v365
    %v1828 = vpop.f32.mrb[0].mxu0
    %v1829 = vadd.f32 %v1786, %v1828
    %v1830 = vpop.f32.mrb[0].mxu0
    %v1831 = vadd.f32 %v1788, %v1830
    %v1832 = vpop.f32.mrb[0].mxu0
    %v1833 = vadd.f32 %v1790, %v1832
    %v1834 = vpop.f32.mrb[0].mxu0
    %v1835 = vadd.f32 %v1792, %v1834
    %1836 = vdwg.mxu0
    %v1837 = vmax.f32 %v1657, 0.0
    %v1838 = vmax.f32 %v1659, 0.0
    %v1839 = vmax.f32 %v1829, 0.0
    %v1840 = vmax.f32 %v1831, 0.0
    %v1841 = vmax.f32 %v1661, 0.0
    %v1842 = vmax.f32 %v1663, 0.0
    %v1843 = vmax.f32 %v1833, 0.0
    %v1844 = vmax.f32 %v1835, 0.0
    %v1845 = vpack.c.bf16 %v1841, %v1837
    %v1846 = vpack.c.bf16 %v1842, %v1838
    %v1847 = vpack.c.bf16 %v1843, %v1839
    %v1848 = vpack.c.bf16 %v1844, %v1840
    %v1849 = vld [vmem:[#allocation7] sm:$0xff]
    %v1850 = vld [vmem:[#allocation7 + $0x8] sm:$0xff]
    %v1851 = vld [vmem:[#allocation7 + $0x10] sm:$0xff]
    %v1852 = vld [vmem:[#allocation7 + $0x18] sm:$0xff]
    %v1853 = vld [vmem:[#allocation7 + $0x20] sm:$0xff]
    %v1854 = vld [vmem:[#allocation7 + $0x28] sm:$0xff]
    %v1855 = vld [vmem:[#allocation7 + $0x30] sm:$0xff]
    %v1856 = vld [vmem:[#allocation7 + $0x38] sm:$0xff]
    %v1857 = vld [vmem:[#allocation7 + $0x40] sm:$0xff]
    %v1858 = vld [vmem:[#allocation7 + $0x48] sm:$0xff]
    %v1859 = vld [vmem:[#allocation7 + $0x50] sm:$0xff]
    %v1860 = vld [vmem:[#allocation7 + $0x58] sm:$0xff]
    %v1861 = vld [vmem:[#allocation7 + $0x60] sm:$0xff]
    %v1862 = vld [vmem:[#allocation7 + $0x68] sm:$0xff]
    %v1863 = vld [vmem:[#allocation7 + $0x70] sm:$0xff]
    %v1864 = vld [vmem:[#allocation7 + $0x78] sm:$0xff]
    %v1865 = vld [vmem:[#allocation7 + $0x80] sm:$0xff]
    %v1866 = vld [vmem:[#allocation7 + $0x88] sm:$0xff]
    %v1867 = vld [vmem:[#allocation7 + $0x90] sm:$0xff]
    %v1868 = vld [vmem:[#allocation7 + $0x98] sm:$0xff]
    %v1869 = vld [vmem:[#allocation7 + $0xa0] sm:$0xff]
    %v1870 = vld [vmem:[#allocation7 + $0xa8] sm:$0xff]
    %v1871 = vld [vmem:[#allocation7 + $0xb0] sm:$0xff]
    %v1872 = vld [vmem:[#allocation7 + $0xb8] sm:$0xff]
    %v1873 = vld [vmem:[#allocation7 + $0xc0] sm:$0xff]
    %v1874 = vld [vmem:[#allocation7 + $0xc8] sm:$0xff]
    %v1875 = vld [vmem:[#allocation7 + $0xd0] sm:$0xff]
    %v1876 = vld [vmem:[#allocation7 + $0xd8] sm:$0xff]
    %v1877 = vld [vmem:[#allocation7 + $0xe0] sm:$0xff]
    %v1878 = vld [vmem:[#allocation7 + $0xe8] sm:$0xff]
    %v1879 = vld [vmem:[#allocation7 + $0xf0] sm:$0xff]
    %v1880 = vld [vmem:[#allocation7 + $0xf8] sm:$0xff]
    %v1881 = vld [vmem:[#allocation7 + $0x100] sm:$0xff]
    %v1882 = vld [vmem:[#allocation7 + $0x108] sm:$0xff]
    %v1883 = vld [vmem:[#allocation7 + $0x110] sm:$0xff]
    %v1884 = vld [vmem:[#allocation7 + $0x118] sm:$0xff]
    %v1885 = vld [vmem:[#allocation7 + $0x120] sm:$0xff]
    %v1886 = vld [vmem:[#allocation7 + $0x128] sm:$0xff]
    %v1887 = vld [vmem:[#allocation7 + $0x130] sm:$0xff]
    %v1888 = vld [vmem:[#allocation7 + $0x138] sm:$0xff]
    %v1889 = vld [vmem:[#allocation7 + $0x140] sm:$0xff]
    %v1890 = vld [vmem:[#allocation7 + $0x148] sm:$0xff]
    %v1891 = vld [vmem:[#allocation7 + $0x150] sm:$0xff]
    %v1892 = vld [vmem:[#allocation7 + $0x158] sm:$0xff]
    %v1893 = vld [vmem:[#allocation7 + $0x160] sm:$0xff]
    %v1894 = vld [vmem:[#allocation7 + $0x168] sm:$0xff]
    %v1895 = vld [vmem:[#allocation7 + $0x170] sm:$0xff]
    %v1896 = vld [vmem:[#allocation7 + $0x178] sm:$0xff]
    %v1897 = vld [vmem:[#allocation7 + $0x180] sm:$0xff]
    %v1898 = vld [vmem:[#allocation7 + $0x188] sm:$0xff]
    %v1899 = vld [vmem:[#allocation7 + $0x190] sm:$0xff]
    %v1900 = vld [vmem:[#allocation7 + $0x198] sm:$0xff]
    %v1901 = vld [vmem:[#allocation7 + $0x1a0] sm:$0xff]
    %v1902 = vld [vmem:[#allocation7 + $0x1a8] sm:$0xff]
    %v1903 = vld [vmem:[#allocation7 + $0x1b0] sm:$0xff]
    %v1904 = vld [vmem:[#allocation7 + $0x1b8] sm:$0xff]
    %v1905 = vld [vmem:[#allocation7 + $0x1c0] sm:$0xff]
    %v1906 = vld [vmem:[#allocation7 + $0x1c8] sm:$0xff]
    %v1907 = vld [vmem:[#allocation7 + $0x1d0] sm:$0xff]
    %v1908 = vld [vmem:[#allocation7 + $0x1d8] sm:$0xff]
    %v1909 = vld [vmem:[#allocation7 + $0x1e0] sm:$0xff]
    %v1910 = vld [vmem:[#allocation7 + $0x1e8] sm:$0xff]
    %v1911 = vld [vmem:[#allocation7 + $0x1f0] sm:$0xff]
    %v1912 = vld [vmem:[#allocation7 + $0x1f8] sm:$0xff]
    %v1913 = vld [vmem:[#allocation7 + $0x200] sm:$0xff]
    %v1914 = vld [vmem:[#allocation7 + $0x208] sm:$0xff]
    %v1915 = vld [vmem:[#allocation7 + $0x210] sm:$0xff]
    %v1916 = vld [vmem:[#allocation7 + $0x218] sm:$0xff]
    %v1917 = vld [vmem:[#allocation7 + $0x220] sm:$0xff]
    %v1918 = vld [vmem:[#allocation7 + $0x228] sm:$0xff]
    %v1919 = vld [vmem:[#allocation7 + $0x230] sm:$0xff]
    %v1920 = vld [vmem:[#allocation7 + $0x238] sm:$0xff]
    %v1921 = vld [vmem:[#allocation7 + $0x240] sm:$0xff]
    %v1922 = vld [vmem:[#allocation7 + $0x248] sm:$0xff]
    %v1923 = vld [vmem:[#allocation7 + $0x250] sm:$0xff]
    %v1924 = vld [vmem:[#allocation7 + $0x258] sm:$0xff]
    %v1925 = vld [vmem:[#allocation7 + $0x260] sm:$0xff]
    %v1926 = vld [vmem:[#allocation7 + $0x268] sm:$0xff]
    %v1927 = vld [vmem:[#allocation7 + $0x270] sm:$0xff]
    %v1928 = vld [vmem:[#allocation7 + $0x278] sm:$0xff]
    %v1929 = vld [vmem:[#allocation7 + $0x280] sm:$0xff]
    %v1930 = vld [vmem:[#allocation7 + $0x288] sm:$0xff]
    %v1931 = vld [vmem:[#allocation7 + $0x290] sm:$0xff]
    %v1932 = vld [vmem:[#allocation7 + $0x298] sm:$0xff]
    %v1933 = vld [vmem:[#allocation7 + $0x2a0] sm:$0xff]
    %v1934 = vld [vmem:[#allocation7 + $0x2a8] sm:$0xff]
    %v1935 = vld [vmem:[#allocation7 + $0x2b0] sm:$0xff]
    %v1936 = vld [vmem:[#allocation7 + $0x2b8] sm:$0xff]
    %v1937 = vld [vmem:[#allocation7 + $0x2c0] sm:$0xff]
    %v1938 = vld [vmem:[#allocation7 + $0x2c8] sm:$0xff]
    %v1939 = vld [vmem:[#allocation7 + $0x2d0] sm:$0xff]
    %v1940 = vld [vmem:[#allocation7 + $0x2d8] sm:$0xff]
    %v1941 = vld [vmem:[#allocation7 + $0x2e0] sm:$0xff]
    %v1942 = vld [vmem:[#allocation7 + $0x2e8] sm:$0xff]
    %v1943 = vld [vmem:[#allocation7 + $0x2f0] sm:$0xff]
    %v1944 = vld [vmem:[#allocation7 + $0x2f8] sm:$0xff]
    %v1945 = vld [vmem:[#allocation7 + $0x300] sm:$0xff]
    %v1946 = vld [vmem:[#allocation7 + $0x308] sm:$0xff]
    %v1947 = vld [vmem:[#allocation7 + $0x310] sm:$0xff]
    %v1948 = vld [vmem:[#allocation7 + $0x318] sm:$0xff]
    %v1949 = vld [vmem:[#allocation7 + $0x320] sm:$0xff]
    %v1950 = vld [vmem:[#allocation7 + $0x328] sm:$0xff]
    %v1951 = vld [vmem:[#allocation7 + $0x330] sm:$0xff]
    %v1952 = vld [vmem:[#allocation7 + $0x338] sm:$0xff]
    %v1953 = vld [vmem:[#allocation7 + $0x340] sm:$0xff]
    %v1954 = vld [vmem:[#allocation7 + $0x348] sm:$0xff]
    %v1955 = vld [vmem:[#allocation7 + $0x350] sm:$0xff]
    %v1956 = vld [vmem:[#allocation7 + $0x358] sm:$0xff]
    %v1957 = vld [vmem:[#allocation7 + $0x360] sm:$0xff]
    %v1958 = vld [vmem:[#allocation7 + $0x368] sm:$0xff]
    %v1959 = vld [vmem:[#allocation7 + $0x370] sm:$0xff]
    %v1960 = vld [vmem:[#allocation7 + $0x378] sm:$0xff]
    %v1961 = vld [vmem:[#allocation7 + $0x380] sm:$0xff]
    %v1962 = vld [vmem:[#allocation7 + $0x388] sm:$0xff]
    %v1963 = vld [vmem:[#allocation7 + $0x390] sm:$0xff]
    %v1964 = vld [vmem:[#allocation7 + $0x398] sm:$0xff]
    %v1965 = vld [vmem:[#allocation7 + $0x3a0] sm:$0xff]
    %v1966 = vld [vmem:[#allocation7 + $0x3a8] sm:$0xff]
    %v1967 = vld [vmem:[#allocation7 + $0x3b0] sm:$0xff]
    %v1968 = vld [vmem:[#allocation7 + $0x3b8] sm:$0xff]
    %v1969 = vld [vmem:[#allocation7 + $0x3c0] sm:$0xff]
    %v1970 = vld [vmem:[#allocation7 + $0x3c8] sm:$0xff]
    %v1971 = vld [vmem:[#allocation7 + $0x3d0] sm:$0xff]
    %v1972 = vld [vmem:[#allocation7 + $0x3d8] sm:$0xff]
    %v1973 = vld [vmem:[#allocation7 + $0x3e0] sm:$0xff]
    %v1974 = vld [vmem:[#allocation7 + $0x3e8] sm:$0xff]
    %v1975 = vld [vmem:[#allocation7 + $0x3f0] sm:$0xff]
    %v1976 = vld [vmem:[#allocation7 + $0x3f8] sm:$0xff]
    %v1977 = vld [vmem:[%s4] sm:$0xf]
    %v1979 = vlaneseq
    %v1980 = vshrl.u32 %v1979, 7
    %v1981 = vsub.s32 0, %v1980
    %v1982 = vrot.slane %v1977, %v1981
    %v1983 = vlaneseq
    %v1984 = vshrl.u32 %v1983, 7
    %v1985 = vsub.s32 1, %v1984
    %v1986 = vrot.slane %v1977, %v1985
    %v1987 = vlaneseq
    %v1988 = vshrl.u32 %v1987, 7
    %v1989 = vsub.s32 2, %v1988
    %v1990 = vrot.slane %v1977, %v1989
    %v1991 = vlaneseq
    %v1992 = vshrl.u32 %v1991, 7
    %v1993 = vsub.s32 3, %v1992
    %v1994 = vrot.slane %v1977, %v1993
    %v2127 = vunpack.c.l.b16 %v1849
    %v2128 = vunpack.c.h.b16 %v1849
    %v2129 = vunpack.c.l.b16 %v1850
    %v2130 = vunpack.c.h.b16 %v1850
    %v2131 = vunpack.c.l.b16 %v1851
    %v2132 = vunpack.c.h.b16 %v1851
    %v2133 = vunpack.c.l.b16 %v1852
    %v2134 = vunpack.c.h.b16 %v1852
    %v2135 = vunpack.c.l.b16 %v1853
    %v2136 = vunpack.c.h.b16 %v1853
    %v2137 = vunpack.c.l.b16 %v1854
    %v2138 = vunpack.c.h.b16 %v1854
    %v2139 = vunpack.c.l.b16 %v1855
    %v2140 = vunpack.c.h.b16 %v1855
    %v2141 = vunpack.c.l.b16 %v1856
    %v2142 = vunpack.c.h.b16 %v1856
    %v2143 = vunpack.c.l.b16 %v1857
    %v2144 = vunpack.c.h.b16 %v1857
    %v2145 = vunpack.c.l.b16 %v1858
    %v2146 = vunpack.c.h.b16 %v1858
    %v2147 = vunpack.c.l.b16 %v1859
    %v2148 = vunpack.c.h.b16 %v1859
    %v2149 = vunpack.c.l.b16 %v1860
    %v2150 = vunpack.c.h.b16 %v1860
    %v2151 = vunpack.c.l.b16 %v1861
    %v2152 = vunpack.c.h.b16 %v1861
    %v2153 = vunpack.c.l.b16 %v1862
    %v2154 = vunpack.c.h.b16 %v1862
    %v2155 = vunpack.c.l.b16 %v1863
    %v2156 = vunpack.c.h.b16 %v1863
    %v2157 = vunpack.c.l.b16 %v1864
    %v2158 = vunpack.c.h.b16 %v1864
    %v2159 = vunpack.c.l.b16 %v1865
    %v2160 = vunpack.c.h.b16 %v1865
    %v2161 = vunpack.c.l.b16 %v1866
    %v2162 = vunpack.c.h.b16 %v1866
    %v2163 = vunpack.c.l.b16 %v1867
    %v2164 = vunpack.c.h.b16 %v1867
    %v2165 = vunpack.c.l.b16 %v1868
    %v2166 = vunpack.c.h.b16 %v1868
    %v2167 = vunpack.c.l.b16 %v1869
    %v2168 = vunpack.c.h.b16 %v1869
    %v2169 = vunpack.c.l.b16 %v1870
    %v2170 = vunpack.c.h.b16 %v1870
    %v2171 = vunpack.c.l.b16 %v1871
    %v2172 = vunpack.c.h.b16 %v1871
    %v2173 = vunpack.c.l.b16 %v1872
    %v2174 = vunpack.c.h.b16 %v1872
    %v2175 = vunpack.c.l.b16 %v1873
    %v2176 = vunpack.c.h.b16 %v1873
    %v2177 = vunpack.c.l.b16 %v1874
    %v2178 = vunpack.c.h.b16 %v1874
    %v2179 = vunpack.c.l.b16 %v1875
    %v2180 = vunpack.c.h.b16 %v1875
    %v2181 = vunpack.c.l.b16 %v1876
    %v2182 = vunpack.c.h.b16 %v1876
    %v2183 = vunpack.c.l.b16 %v1877
    %v2184 = vunpack.c.h.b16 %v1877
    %v2185 = vunpack.c.l.b16 %v1878
    %v2186 = vunpack.c.h.b16 %v1878
    %v2187 = vunpack.c.l.b16 %v1879
    %v2188 = vunpack.c.h.b16 %v1879
    %v2189 = vunpack.c.l.b16 %v1880
    %v2190 = vunpack.c.h.b16 %v1880
    %v2191 = vunpack.c.l.b16 %v1881
    %v2192 = vunpack.c.h.b16 %v1881
    %v2193 = vunpack.c.l.b16 %v1882
    %v2194 = vunpack.c.h.b16 %v1882
    %v2195 = vunpack.c.l.b16 %v1883
    %v2196 = vunpack.c.h.b16 %v1883
    %v2197 = vunpack.c.l.b16 %v1884
    %v2198 = vunpack.c.h.b16 %v1884
    %v2199 = vunpack.c.l.b16 %v1885
    %v2200 = vunpack.c.h.b16 %v1885
    %v2201 = vunpack.c.l.b16 %v1886
    %v2202 = vunpack.c.h.b16 %v1886
    %v2203 = vunpack.c.l.b16 %v1887
    %v2204 = vunpack.c.h.b16 %v1887
    %v2205 = vunpack.c.l.b16 %v1888
    %v2206 = vunpack.c.h.b16 %v1888
    %v2207 = vunpack.c.l.b16 %v1889
    %v2208 = vunpack.c.h.b16 %v1889
    %v2209 = vunpack.c.l.b16 %v1890
    %v2210 = vunpack.c.h.b16 %v1890
    %v2211 = vunpack.c.l.b16 %v1891
    %v2212 = vunpack.c.h.b16 %v1891
    %v2213 = vunpack.c.l.b16 %v1892
    %v2214 = vunpack.c.h.b16 %v1892
    %v2215 = vunpack.c.l.b16 %v1893
    %v2216 = vunpack.c.h.b16 %v1893
    %v2217 = vunpack.c.l.b16 %v1894
    %v2218 = vunpack.c.h.b16 %v1894
    %v2219 = vunpack.c.l.b16 %v1895
    %v2220 = vunpack.c.h.b16 %v1895
    %v2221 = vunpack.c.l.b16 %v1896
    %v2222 = vunpack.c.h.b16 %v1896
    %v2223 = vunpack.c.l.b16 %v1897
    %v2224 = vunpack.c.h.b16 %v1897
    %v2225 = vunpack.c.l.b16 %v1898
    %v2226 = vunpack.c.h.b16 %v1898
    %v2227 = vunpack.c.l.b16 %v1899
    %v2228 = vunpack.c.h.b16 %v1899
    %v2229 = vunpack.c.l.b16 %v1900
    %v2230 = vunpack.c.h.b16 %v1900
    %v2231 = vunpack.c.l.b16 %v1901
    %v2232 = vunpack.c.h.b16 %v1901
    %v2233 = vunpack.c.l.b16 %v1902
    %v2234 = vunpack.c.h.b16 %v1902
    %v2235 = vunpack.c.l.b16 %v1903
    %v2236 = vunpack.c.h.b16 %v1903
    %v2237 = vunpack.c.l.b16 %v1904
    %v2238 = vunpack.c.h.b16 %v1904
    %v2239 = vunpack.c.l.b16 %v1905
    %v2240 = vunpack.c.h.b16 %v1905
    %v2241 = vunpack.c.l.b16 %v1906
    %v2242 = vunpack.c.h.b16 %v1906
    %v2243 = vunpack.c.l.b16 %v1907
    %v2244 = vunpack.c.h.b16 %v1907
    %v2245 = vunpack.c.l.b16 %v1908
    %v2246 = vunpack.c.h.b16 %v1908
    %v2247 = vunpack.c.l.b16 %v1909
    %v2248 = vunpack.c.h.b16 %v1909
    %v2249 = vunpack.c.l.b16 %v1910
    %v2250 = vunpack.c.h.b16 %v1910
    %v2251 = vunpack.c.l.b16 %v1911
    %v2252 = vunpack.c.h.b16 %v1911
    %v2253 = vunpack.c.l.b16 %v1912
    %v2254 = vunpack.c.h.b16 %v1912
    %v2255 = vunpack.c.l.b16 %v1913
    %v2256 = vunpack.c.h.b16 %v1913
    %v2257 = vunpack.c.l.b16 %v1914
    %v2258 = vunpack.c.h.b16 %v1914
    %v2259 = vunpack.c.l.b16 %v1915
    %v2260 = vunpack.c.h.b16 %v1915
    %v2261 = vunpack.c.l.b16 %v1916
    %v2262 = vunpack.c.h.b16 %v1916
    %v2263 = vunpack.c.l.b16 %v1917
    %v2264 = vunpack.c.h.b16 %v1917
    %v2265 = vunpack.c.l.b16 %v1918
    %v2266 = vunpack.c.h.b16 %v1918
    %v2267 = vunpack.c.l.b16 %v1919
    %v2268 = vunpack.c.h.b16 %v1919
    %v2269 = vunpack.c.l.b16 %v1920
    %v2270 = vunpack.c.h.b16 %v1920
    %v2271 = vunpack.c.l.b16 %v1921
    %v2272 = vunpack.c.h.b16 %v1921
    %v2273 = vunpack.c.l.b16 %v1922
    %v2274 = vunpack.c.h.b16 %v1922
    %v2275 = vunpack.c.l.b16 %v1923
    %v2276 = vunpack.c.h.b16 %v1923
    %v2277 = vunpack.c.l.b16 %v1924
    %v2278 = vunpack.c.h.b16 %v1924
    %v2279 = vunpack.c.l.b16 %v1925
    %v2280 = vunpack.c.h.b16 %v1925
    %v2281 = vunpack.c.l.b16 %v1926
    %v2282 = vunpack.c.h.b16 %v1926
    %v2283 = vunpack.c.l.b16 %v1927
    %v2284 = vunpack.c.h.b16 %v1927
    %v2285 = vunpack.c.l.b16 %v1928
    %v2286 = vunpack.c.h.b16 %v1928
    %v2287 = vunpack.c.l.b16 %v1929
    %v2288 = vunpack.c.h.b16 %v1929
    %v2289 = vunpack.c.l.b16 %v1930
    %v2290 = vunpack.c.h.b16 %v1930
    %v2291 = vunpack.c.l.b16 %v1931
    %v2292 = vunpack.c.h.b16 %v1931
    %v2293 = vunpack.c.l.b16 %v1932
    %v2294 = vunpack.c.h.b16 %v1932
    %v2295 = vunpack.c.l.b16 %v1933
    %v2296 = vunpack.c.h.b16 %v1933
    %v2297 = vunpack.c.l.b16 %v1934
    %v2298 = vunpack.c.h.b16 %v1934
    %v2299 = vunpack.c.l.b16 %v1935
    %v2300 = vunpack.c.h.b16 %v1935
    %v2301 = vunpack.c.l.b16 %v1936
    %v2302 = vunpack.c.h.b16 %v1936
    %v2303 = vunpack.c.l.b16 %v1937
    %v2304 = vunpack.c.h.b16 %v1937
    %v2305 = vunpack.c.l.b16 %v1938
    %v2306 = vunpack.c.h.b16 %v1938
    %v2307 = vunpack.c.l.b16 %v1939
    %v2308 = vunpack.c.h.b16 %v1939
    %v2309 = vunpack.c.l.b16 %v1940
    %v2310 = vunpack.c.h.b16 %v1940
    %v2311 = vunpack.c.l.b16 %v1941
    %v2312 = vunpack.c.h.b16 %v1941
    %v2313 = vunpack.c.l.b16 %v1942
    %v2314 = vunpack.c.h.b16 %v1942
    %v2315 = vunpack.c.l.b16 %v1943
    %v2316 = vunpack.c.h.b16 %v1943
    %v2317 = vunpack.c.l.b16 %v1944
    %v2318 = vunpack.c.h.b16 %v1944
    %v2319 = vunpack.c.l.b16 %v1945
    %v2320 = vunpack.c.h.b16 %v1945
    %v2321 = vunpack.c.l.b16 %v1946
    %v2322 = vunpack.c.h.b16 %v1946
    %v2323 = vunpack.c.l.b16 %v1947
    %v2324 = vunpack.c.h.b16 %v1947
    %v2325 = vunpack.c.l.b16 %v1948
    %v2326 = vunpack.c.h.b16 %v1948
    %v2327 = vunpack.c.l.b16 %v1949
    %v2328 = vunpack.c.h.b16 %v1949
    %v2329 = vunpack.c.l.b16 %v1950
    %v2330 = vunpack.c.h.b16 %v1950
    %v2331 = vunpack.c.l.b16 %v1951
    %v2332 = vunpack.c.h.b16 %v1951
    %v2333 = vunpack.c.l.b16 %v1952
    %v2334 = vunpack.c.h.b16 %v1952
    %v2335 = vunpack.c.l.b16 %v1953
    %v2336 = vunpack.c.h.b16 %v1953
    %v2337 = vunpack.c.l.b16 %v1954
    %v2338 = vunpack.c.h.b16 %v1954
    %v2339 = vunpack.c.l.b16 %v1955
    %v2340 = vunpack.c.h.b16 %v1955
    %v2341 = vunpack.c.l.b16 %v1956
    %v2342 = vunpack.c.h.b16 %v1956
    %v2343 = vunpack.c.l.b16 %v1957
    %v2344 = vunpack.c.h.b16 %v1957
    %v2345 = vunpack.c.l.b16 %v1958
    %v2346 = vunpack.c.h.b16 %v1958
    %v2347 = vunpack.c.l.b16 %v1959
    %v2348 = vunpack.c.h.b16 %v1959
    %v2349 = vunpack.c.l.b16 %v1960
    %v2350 = vunpack.c.h.b16 %v1960
    %v2351 = vunpack.c.l.b16 %v1961
    %v2352 = vunpack.c.h.b16 %v1961
    %v2353 = vunpack.c.l.b16 %v1962
    %v2354 = vunpack.c.h.b16 %v1962
    %v2355 = vunpack.c.l.b16 %v1963
    %v2356 = vunpack.c.h.b16 %v1963
    %v2357 = vunpack.c.l.b16 %v1964
    %v2358 = vunpack.c.h.b16 %v1964
    %v2359 = vunpack.c.l.b16 %v1965
    %v2360 = vunpack.c.h.b16 %v1965
    %v2361 = vunpack.c.l.b16 %v1966
    %v2362 = vunpack.c.h.b16 %v1966
    %v2363 = vunpack.c.l.b16 %v1967
    %v2364 = vunpack.c.h.b16 %v1967
    %v2365 = vunpack.c.l.b16 %v1968
    %v2366 = vunpack.c.h.b16 %v1968
    %v2367 = vunpack.c.l.b16 %v1969
    %v2368 = vunpack.c.h.b16 %v1969
    %v2369 = vunpack.c.l.b16 %v1970
    %v2370 = vunpack.c.h.b16 %v1970
    %v2371 = vunpack.c.l.b16 %v1971
    %v2372 = vunpack.c.h.b16 %v1971
    %v2373 = vunpack.c.l.b16 %v1972
    %v2374 = vunpack.c.h.b16 %v1972
    %v2375 = vunpack.c.l.b16 %v1973
    %v2376 = vunpack.c.h.b16 %v1973
    %v2377 = vunpack.c.l.b16 %v1974
    %v2378 = vunpack.c.h.b16 %v1974
    %v2379 = vunpack.c.l.b16 %v1975
    %v2380 = vunpack.c.h.b16 %v1975
    %v2381 = vunpack.c.l.b16 %v1976
    %v2382 = vunpack.c.h.b16 %v1976
    %v2383 = vpack.c.b16 %v2131, %v2127
    %v2384 = vpack.c.b16 %v2132, %v2128
    %v2385 = vpack.c.b16 %v2133, %v2129
    %v2386 = vpack.c.b16 %v2134, %v2130
    %v2387 = vpack.c.b16 %v2139, %v2135
    %v2388 = vpack.c.b16 %v2140, %v2136
    %v2389 = vpack.c.b16 %v2141, %v2137
    %v2390 = vpack.c.b16 %v2142, %v2138
    %v2391 = vpack.c.b16 %v2147, %v2143
    %v2392 = vpack.c.b16 %v2148, %v2144
    %v2393 = vpack.c.b16 %v2149, %v2145
    %v2394 = vpack.c.b16 %v2150, %v2146
    %v2395 = vpack.c.b16 %v2155, %v2151
    %v2396 = vpack.c.b16 %v2156, %v2152
    %v2397 = vpack.c.b16 %v2157, %v2153
    %v2398 = vpack.c.b16 %v2158, %v2154
    %v2399 = vpack.c.b16 %v2163, %v2159
    %v2400 = vpack.c.b16 %v2164, %v2160
    %v2401 = vpack.c.b16 %v2165, %v2161
    %v2402 = vpack.c.b16 %v2166, %v2162
    %v2403 = vpack.c.b16 %v2171, %v2167
    %v2404 = vpack.c.b16 %v2172, %v2168
    %v2405 = vpack.c.b16 %v2173, %v2169
    %v2406 = vpack.c.b16 %v2174, %v2170
    %v2407 = vpack.c.b16 %v2179, %v2175
    %v2408 = vpack.c.b16 %v2180, %v2176
    %v2409 = vpack.c.b16 %v2181, %v2177
    %v2410 = vpack.c.b16 %v2182, %v2178
    %v2411 = vpack.c.b16 %v2187, %v2183
    %v2412 = vpack.c.b16 %v2188, %v2184
    %v2413 = vpack.c.b16 %v2189, %v2185
    %v2414 = vpack.c.b16 %v2190, %v2186
    %v2415 = vpack.c.b16 %v2195, %v2191
    %v2416 = vpack.c.b16 %v2196, %v2192
    %v2417 = vpack.c.b16 %v2197, %v2193
    %v2418 = vpack.c.b16 %v2198, %v2194
    %v2419 = vpack.c.b16 %v2203, %v2199
    %v2420 = vpack.c.b16 %v2204, %v2200
    %v2421 = vpack.c.b16 %v2205, %v2201
    %v2422 = vpack.c.b16 %v2206, %v2202
    %v2423 = vpack.c.b16 %v2211, %v2207
    %v2424 = vpack.c.b16 %v2212, %v2208
    %v2425 = vpack.c.b16 %v2213, %v2209
    %v2426 = vpack.c.b16 %v2214, %v2210
    %v2427 = vpack.c.b16 %v2219, %v2215
    %v2428 = vpack.c.b16 %v2220, %v2216
    %v2429 = vpack.c.b16 %v2221, %v2217
    %v2430 = vpack.c.b16 %v2222, %v2218
    %v2431 = vpack.c.b16 %v2227, %v2223
    %v2432 = vpack.c.b16 %v2228, %v2224
    %v2433 = vpack.c.b16 %v2229, %v2225
    %v2434 = vpack.c.b16 %v2230, %v2226
    %v2435 = vpack.c.b16 %v2235, %v2231
    %v2436 = vpack.c.b16 %v2236, %v2232
    %v2437 = vpack.c.b16 %v2237, %v2233
    %v2438 = vpack.c.b16 %v2238, %v2234
    %v2439 = vpack.c.b16 %v2243, %v2239
    %v2440 = vpack.c.b16 %v2244, %v2240
    %v2441 = vpack.c.b16 %v2245, %v2241
    %v2442 = vpack.c.b16 %v2246, %v2242
    %v2443 = vpack.c.b16 %v2251, %v2247
    %v2444 = vpack.c.b16 %v2252, %v2248
    %v2445 = vpack.c.b16 %v2253, %v2249
    %v2446 = vpack.c.b16 %v2254, %v2250
    %v2447 = vpack.c.b16 %v2259, %v2255
    %v2448 = vpack.c.b16 %v2260, %v2256
    %v2449 = vpack.c.b16 %v2261, %v2257
    %v2450 = vpack.c.b16 %v2262, %v2258
    %v2451 = vpack.c.b16 %v2267, %v2263
    %v2452 = vpack.c.b16 %v2268, %v2264
    %v2453 = vpack.c.b16 %v2269, %v2265
    %v2454 = vpack.c.b16 %v2270, %v2266
    %v2455 = vpack.c.b16 %v2275, %v2271
    %v2456 = vpack.c.b16 %v2276, %v2272
    %v2457 = vpack.c.b16 %v2277, %v2273
    %v2458 = vpack.c.b16 %v2278, %v2274
    %v2459 = vpack.c.b16 %v2283, %v2279
    %v2460 = vpack.c.b16 %v2284, %v2280
    %v2461 = vpack.c.b16 %v2285, %v2281
    %v2462 = vpack.c.b16 %v2286, %v2282
    %v2463 = vpack.c.b16 %v2291, %v2287
    %v2464 = vpack.c.b16 %v2292, %v2288
    %v2465 = vpack.c.b16 %v2293, %v2289
    %v2466 = vpack.c.b16 %v2294, %v2290
    %v2467 = vpack.c.b16 %v2299, %v2295
    %v2468 = vpack.c.b16 %v2300, %v2296
    %v2469 = vpack.c.b16 %v2301, %v2297
    %v2470 = vpack.c.b16 %v2302, %v2298
    %v2471 = vpack.c.b16 %v2307, %v2303
    %v2472 = vpack.c.b16 %v2308, %v2304
    %v2473 = vpack.c.b16 %v2309, %v2305
    %v2474 = vpack.c.b16 %v2310, %v2306
    %v2475 = vpack.c.b16 %v2315, %v2311
    %v2476 = vpack.c.b16 %v2316, %v2312
    %v2477 = vpack.c.b16 %v2317, %v2313
    %v2478 = vpack.c.b16 %v2318, %v2314
    %v2479 = vpack.c.b16 %v2323, %v2319
    %v2480 = vpack.c.b16 %v2324, %v2320
    %v2481 = vpack.c.b16 %v2325, %v2321
    %v2482 = vpack.c.b16 %v2326, %v2322
    %v2483 = vpack.c.b16 %v2331, %v2327
    %v2484 = vpack.c.b16 %v2332, %v2328
    %v2485 = vpack.c.b16 %v2333, %v2329
    %v2486 = vpack.c.b16 %v2334, %v2330
    %v2487 = vpack.c.b16 %v2339, %v2335
    %v2488 = vpack.c.b16 %v2340, %v2336
    %v2489 = vpack.c.b16 %v2341, %v2337
    %v2490 = vpack.c.b16 %v2342, %v2338
    %v2491 = vpack.c.b16 %v2347, %v2343
    %v2492 = vpack.c.b16 %v2348, %v2344
    %v2493 = vpack.c.b16 %v2349, %v2345
    %v2494 = vpack.c.b16 %v2350, %v2346
    %v2495 = vpack.c.b16 %v2355, %v2351
    %v2496 = vpack.c.b16 %v2356, %v2352
    %v2497 = vpack.c.b16 %v2357, %v2353
    %v2498 = vpack.c.b16 %v2358, %v2354
    %v2499 = vpack.c.b16 %v2363, %v2359
    %v2500 = vpack.c.b16 %v2364, %v2360
    %v2501 = vpack.c.b16 %v2365, %v2361
    %v2502 = vpack.c.b16 %v2366, %v2362
    %v2503 = vpack.c.b16 %v2371, %v2367
    %v2504 = vpack.c.b16 %v2372, %v2368
    %v2505 = vpack.c.b16 %v2373, %v2369
    %v2506 = vpack.c.b16 %v2374, %v2370
    %v2507 = vpack.c.b16 %v2379, %v2375
    %v2508 = vpack.c.b16 %v2380, %v2376
    %v2509 = vpack.c.b16 %v2381, %v2377
    %v2510 = vpack.c.b16 %v2382, %v2378
    %2639 = vmatprep.subr.bf16.mxu0 %v2384
    %2640 = vmatpush1.bf16.msra.mxu0 %v2383
    %2641 = vmatprep.subr.bf16.mxu0 %v2388
    %2642 = vmatpush1.bf16.msra.mxu0 %v2387
    %2643 = vmatprep.subr.bf16.mxu0 %v2392
    %2644 = vmatpush1.bf16.msra.mxu0 %v2391
    %2645 = vmatprep.subr.bf16.mxu0 %v2396
    %2646 = vmatpush1.bf16.msra.mxu0 %v2395
    %2647 = vmatprep.subr.bf16.mxu0 %v2400
    %2648 = vmatpush1.bf16.msra.mxu0 %v2399
    %2649 = vmatprep.subr.bf16.mxu0 %v2404
    %2650 = vmatpush1.bf16.msra.mxu0 %v2403
    %2651 = vmatprep.subr.bf16.mxu0 %v2408
    %2652 = vmatpush1.bf16.msra.mxu0 %v2407
    %2653 = vmatprep.subr.bf16.mxu0 %v2412
    %2654 = vmatpush1.bf16.msra.mxu0 %v2411
    %2655 = vmatprep.subr.bf16.mxu0 %v2416
    %2656 = vmatpush1.bf16.msra.mxu0 %v2415
    %2657 = vmatprep.subr.bf16.mxu0 %v2420
    %2658 = vmatpush1.bf16.msra.mxu0 %v2419
    %2659 = vmatprep.subr.bf16.mxu0 %v2424
    %2660 = vmatpush1.bf16.msra.mxu0 %v2423
    %2661 = vmatprep.subr.bf16.mxu0 %v2428
    %2662 = vmatpush1.bf16.msra.mxu0 %v2427
    %2663 = vmatprep.subr.bf16.mxu0 %v2432
    %2664 = vmatpush1.bf16.msra.mxu0 %v2431
    %2665 = vmatprep.subr.bf16.mxu0 %v2436
    %2666 = vmatpush1.bf16.msra.mxu0 %v2435
    %2667 = vmatprep.subr.bf16.mxu0 %v2440
    %2668 = vmatpush1.bf16.msra.mxu0 %v2439
    %2669 = vmatprep.subr.bf16.mxu0 %v2444
    %2670 = vmatpush1.bf16.msra.mxu0 %v2443
    %2671 = vmatprep.mubr.bf16.mxu0 %v1846
    %2672 = vmatmul.mubr.bf16.gmra.mrb[0].mxu0 %v1845
    %v2673 = vpop.f32.mrb[0].mxu0
    %v2674 = vadd.f32 %v1982, %v2673
    %v2675 = vpop.f32.mrb[0].mxu0
    %v2676 = vadd.f32 %v1986, %v2675
    %v2677 = vpop.f32.mrb[0].mxu0
    %v2678 = vadd.f32 %v1982, %v2677
    %v2679 = vpop.f32.mrb[0].mxu0
    %v2680 = vadd.f32 %v1986, %v2679
    %2681 = vdwg.mxu0
    %2682 = vmatprep.subr.bf16.mxu0 %v2448
    %2683 = vmatpush1.bf16.msra.mxu0 %v2447
    %2684 = vmatprep.subr.bf16.mxu0 %v2452
    %2685 = vmatpush1.bf16.msra.mxu0 %v2451
    %2686 = vmatprep.subr.bf16.mxu0 %v2456
    %2687 = vmatpush1.bf16.msra.mxu0 %v2455
    %2688 = vmatprep.subr.bf16.mxu0 %v2460
    %2689 = vmatpush1.bf16.msra.mxu0 %v2459
    %2690 = vmatprep.subr.bf16.mxu0 %v2464
    %2691 = vmatpush1.bf16.msra.mxu0 %v2463
    %2692 = vmatprep.subr.bf16.mxu0 %v2468
    %2693 = vmatpush1.bf16.msra.mxu0 %v2467
    %2694 = vmatprep.subr.bf16.mxu0 %v2472
    %2695 = vmatpush1.bf16.msra.mxu0 %v2471
    %2696 = vmatprep.subr.bf16.mxu0 %v2476
    %2697 = vmatpush1.bf16.msra.mxu0 %v2475
    %2698 = vmatprep.subr.bf16.mxu0 %v2480
    %2699 = vmatpush1.bf16.msra.mxu0 %v2479
    %2700 = vmatprep.subr.bf16.mxu0 %v2484
    %2701 = vmatpush1.bf16.msra.mxu0 %v2483
    %2702 = vmatprep.subr.bf16.mxu0 %v2488
    %2703 = vmatpush1.bf16.msra.mxu0 %v2487
    %2704 = vmatprep.subr.bf16.mxu0 %v2492
    %2705 = vmatpush1.bf16.msra.mxu0 %v2491
    %2706 = vmatprep.subr.bf16.mxu0 %v2496
    %2707 = vmatpush1.bf16.msra.mxu0 %v2495
    %2708 = vmatprep.subr.bf16.mxu0 %v2500
    %2709 = vmatpush1.bf16.msra.mxu0 %v2499
    %2710 = vmatprep.subr.bf16.mxu0 %v2504
    %2711 = vmatpush1.bf16.msra.mxu0 %v2503
    %2712 = vmatprep.subr.bf16.mxu0 %v2508
    %2713 = vmatpush1.bf16.msra.mxu0 %v2507
    %2714 = vmatprep.mubr.bf16.mxu0 %v1848
    %2715 = vmatmul.mubr.bf16.gmra.mrb[0].mxu0 %v1847
    %v2716 = vpop.f32.mrb[0].mxu0
    %v2717 = vadd.f32 %v2674, %v2716
    %v2718 = vpop.f32.mrb[0].mxu0
    %v2719 = vadd.f32 %v2676, %v2718
    %v2720 = vpop.f32.mrb[0].mxu0
    %v2721 = vadd.f32 %v2678, %v2720
    %v2722 = vpop.f32.mrb[0].mxu0
    %v2723 = vadd.f32 %v2680, %v2722
    %2724 = vdwg.mxu0
    %2725 = vmatprep.subr.bf16.mxu0 %v2386
    %2726 = vmatpush1.bf16.msra.mxu0 %v2385
    %2727 = vmatprep.subr.bf16.mxu0 %v2390
    %2728 = vmatpush1.bf16.msra.mxu0 %v2389
    %2729 = vmatprep.subr.bf16.mxu0 %v2394
    %2730 = vmatpush1.bf16.msra.mxu0 %v2393
    %2731 = vmatprep.subr.bf16.mxu0 %v2398
    %2732 = vmatpush1.bf16.msra.mxu0 %v2397
    %2733 = vmatprep.subr.bf16.mxu0 %v2402
    %2734 = vmatpush1.bf16.msra.mxu0 %v2401
    %2735 = vmatprep.subr.bf16.mxu0 %v2406
    %2736 = vmatpush1.bf16.msra.mxu0 %v2405
    %2737 = vmatprep.subr.bf16.mxu0 %v2410
    %2738 = vmatpush1.bf16.msra.mxu0 %v2409
    %2739 = vmatprep.subr.bf16.mxu0 %v2414
    %2740 = vmatpush1.bf16.msra.mxu0 %v2413
    %2741 = vmatprep.subr.bf16.mxu0 %v2418
    %2742 = vmatpush1.bf16.msra.mxu0 %v2417
    %2743 = vmatprep.subr.bf16.mxu0 %v2422
    %2744 = vmatpush1.bf16.msra.mxu0 %v2421
    %2745 = vmatprep.subr.bf16.mxu0 %v2426
    %2746 = vmatpush1.bf16.msra.mxu0 %v2425
    %2747 = vmatprep.subr.bf16.mxu0 %v2430
    %2748 = vmatpush1.bf16.msra.mxu0 %v2429
    %2749 = vmatprep.subr.bf16.mxu0 %v2434
    %2750 = vmatpush1.bf16.msra.mxu0 %v2433
    %2751 = vmatprep.subr.bf16.mxu0 %v2438
    %2752 = vmatpush1.bf16.msra.mxu0 %v2437
    %2753 = vmatprep.subr.bf16.mxu0 %v2442
    %2754 = vmatpush1.bf16.msra.mxu0 %v2441
    %2755 = vmatprep.subr.bf16.mxu0 %v2446
    %2756 = vmatpush1.bf16.msra.mxu0 %v2445
    %2757 = vmatprep.mubr.bf16.mxu0 %v1846
    %2758 = vmatmul.mubr.bf16.gmra.mrb[0].mxu0 %v1845
    %v2759 = vpop.f32.mrb[0].mxu0
    %v2760 = vadd.f32 %v1990, %v2759
    %v2761 = vpop.f32.mrb[0].mxu0
    %v2762 = vadd.f32 %v1994, %v2761
    %v2763 = vpop.f32.mrb[0].mxu0
    %v2764 = vadd.f32 %v1990, %v2763
    %v2765 = vpop.f32.mrb[0].mxu0
    %v2766 = vadd.f32 %v1994, %v2765
    %2767 = vdwg.mxu0
    %2768 = vmatprep.subr.bf16.mxu0 %v2450
    %2769 = vmatpush1.bf16.msra.mxu0 %v2449
    %2770 = vmatprep.subr.bf16.mxu0 %v2454
    %2771 = vmatpush1.bf16.msra.mxu0 %v2453
    %2772 = vmatprep.subr.bf16.mxu0 %v2458
    %2773 = vmatpush1.bf16.msra.mxu0 %v2457
    %2774 = vmatprep.subr.bf16.mxu0 %v2462
    %2775 = vmatpush1.bf16.msra.mxu0 %v2461
    %2776 = vmatprep.subr.bf16.mxu0 %v2466
    %2777 = vmatpush1.bf16.msra.mxu0 %v2465
    %2778 = vmatprep.subr.bf16.mxu0 %v2470
    %2779 = vmatpush1.bf16.msra.mxu0 %v2469
    %2780 = vmatprep.subr.bf16.mxu0 %v2474
    %2781 = vmatpush1.bf16.msra.mxu0 %v2473
    %2782 = vmatprep.subr.bf16.mxu0 %v2478
    %2783 = vmatpush1.bf16.msra.mxu0 %v2477
    %2784 = vmatprep.subr.bf16.mxu0 %v2482
    %2785 = vmatpush1.bf16.msra.mxu0 %v2481
    %2786 = vmatprep.subr.bf16.mxu0 %v2486
    %2787 = vmatpush1.bf16.msra.mxu0 %v2485
    %2788 = vmatprep.subr.bf16.mxu0 %v2490
    %2789 = vmatpush1.bf16.msra.mxu0 %v2489
    %2790 = vmatprep.subr.bf16.mxu0 %v2494
    %2791 = vmatpush1.bf16.msra.mxu0 %v2493
    %2792 = vmatprep.subr.bf16.mxu0 %v2498
    %2793 = vmatpush1.bf16.msra.mxu0 %v2497
    %2794 = vmatprep.subr.bf16.mxu0 %v2502
    %2795 = vmatpush1.bf16.msra.mxu0 %v2501
    %2796 = vmatprep.subr.bf16.mxu0 %v2506
    %2797 = vmatpush1.bf16.msra.mxu0 %v2505
    %2798 = vmatprep.subr.bf16.mxu0 %v2510
    %2799 = vmatpush1.bf16.msra.mxu0 %v2509
    %2800 = vmatprep.mubr.bf16.mxu0 %v1848
    %2801 = vmatmul.mubr.bf16.gmra.mrb[0].mxu0 %v1847
    %v2802 = vpop.f32.mrb[0].mxu0
    %v2803 = vadd.f32 %v2760, %v2802
    %v2804 = vpop.f32.mrb[0].mxu0
    %v2805 = vadd.f32 %v2762, %v2804
    %v2806 = vpop.f32.mrb[0].mxu0
    %v2807 = vadd.f32 %v2764, %v2806
    %v2808 = vpop.f32.mrb[0].mxu0
    %v2809 = vadd.f32 %v2766, %v2808
    %2810 = vdwg.mxu0
    %v2811 = vmax.f32 %v2717, 0.0
    %v2812 = vmax.f32 %v2719, 0.0
    %v2813 = vmax.f32 %v2803, 0.0
    %v2814 = vmax.f32 %v2805, 0.0
    %v2815 = vmax.f32 %v2721, 0.0
    %v2816 = vmax.f32 %v2723, 0.0
    %v2817 = vmax.f32 %v2807, 0.0
    %v2818 = vmax.f32 %v2809, 0.0
    %v2819 = vpack.c.bf16 %v2815, %v2811
    %v2820 = vpack.c.bf16 %v2816, %v2812
    %v2821 = vpack.c.bf16 %v2817, %v2813
    %v2822 = vpack.c.bf16 %v2818, %v2814
    %v2823 = vld [vmem:[#allocation8] sm:$0xf]
    %v2824 = vld [vmem:[#allocation8 + $0x4] sm:$0xf]
    %v2825 = vld [vmem:[#allocation8 + $0x8] sm:$0xf]
    %v2826 = vld [vmem:[#allocation8 + $0xc] sm:$0xf]
    %v2827 = vld [vmem:[#allocation8 + $0x10] sm:$0xf]
    %v2828 = vld [vmem:[#allocation8 + $0x14] sm:$0xf]
    %v2829 = vld [vmem:[#allocation8 + $0x18] sm:$0xf]
    %v2830 = vld [vmem:[#allocation8 + $0x1c] sm:$0xf]
    %v2831 = vld [vmem:[#allocation8 + $0x20] sm:$0xf]
    %v2832 = vld [vmem:[#allocation8 + $0x24] sm:$0xf]
    %v2833 = vld [vmem:[#allocation8 + $0x28] sm:$0xf]
    %v2834 = vld [vmem:[#allocation8 + $0x2c] sm:$0xf]
    %v2835 = vld [vmem:[#allocation8 + $0x30] sm:$0xf]
    %v2836 = vld [vmem:[#allocation8 + $0x34] sm:$0xf]
    %v2837 = vld [vmem:[#allocation8 + $0x38] sm:$0xf]
    %v2838 = vld [vmem:[#allocation8 + $0x3c] sm:$0xf]
    %v2839 = vld [vmem:[#allocation8 + $0x40] sm:$0xf]
    %v2840 = vld [vmem:[#allocation8 + $0x44] sm:$0xf]
    %v2841 = vld [vmem:[#allocation8 + $0x48] sm:$0xf]
    %v2842 = vld [vmem:[#allocation8 + $0x4c] sm:$0xf]
    %v2843 = vld [vmem:[#allocation8 + $0x50] sm:$0xf]
    %v2844 = vld [vmem:[#allocation8 + $0x54] sm:$0xf]
    %v2845 = vld [vmem:[#allocation8 + $0x58] sm:$0xf]
    %v2846 = vld [vmem:[#allocation8 + $0x5c] sm:$0xf]
    %v2847 = vld [vmem:[#allocation8 + $0x60] sm:$0xf]
    %v2848 = vld [vmem:[#allocation8 + $0x64] sm:$0xf]
    %v2849 = vld [vmem:[#allocation8 + $0x68] sm:$0xf]
    %v2850 = vld [vmem:[#allocation8 + $0x6c] sm:$0xf]
    %v2851 = vld [vmem:[#allocation8 + $0x70] sm:$0xf]
    %v2852 = vld [vmem:[#allocation8 + $0x74] sm:$0xf]
    %v2853 = vld [vmem:[#allocation8 + $0x78] sm:$0xf]
    %v2854 = vld [vmem:[#allocation8 + $0x7c] sm:$0xf]
    %v2855 = vld [vmem:[#allocation8 + $0x80] sm:$0xf]
    %v2856 = vld [vmem:[#allocation8 + $0x84] sm:$0xf]
    %v2857 = vld [vmem:[#allocation8 + $0x88] sm:$0xf]
    %v2858 = vld [vmem:[#allocation8 + $0x8c] sm:$0xf]
    %v2859 = vld [vmem:[#allocation8 + $0x90] sm:$0xf]
    %v2860 = vld [vmem:[#allocation8 + $0x94] sm:$0xf]
    %v2861 = vld [vmem:[#allocation8 + $0x98] sm:$0xf]
    %v2862 = vld [vmem:[#allocation8 + $0x9c] sm:$0xf]
    %v2863 = vld [vmem:[#allocation8 + $0xa0] sm:$0xf]
    %v2864 = vld [vmem:[#allocation8 + $0xa4] sm:$0xf]
    %v2865 = vld [vmem:[#allocation8 + $0xa8] sm:$0xf]
    %v2866 = vld [vmem:[#allocation8 + $0xac] sm:$0xf]
    %v2867 = vld [vmem:[#allocation8 + $0xb0] sm:$0xf]
    %v2868 = vld [vmem:[#allocation8 + $0xb4] sm:$0xf]
    %v2869 = vld [vmem:[#allocation8 + $0xb8] sm:$0xf]
    %v2870 = vld [vmem:[#allocation8 + $0xbc] sm:$0xf]
    %v2871 = vld [vmem:[#allocation8 + $0xc0] sm:$0xf]
    %v2872 = vld [vmem:[#allocation8 + $0xc4] sm:$0xf]
    %v2873 = vld [vmem:[#allocation8 + $0xc8] sm:$0xf]
    %v2874 = vld [vmem:[#allocation8 + $0xcc] sm:$0xf]
    %v2875 = vld [vmem:[#allocation8 + $0xd0] sm:$0xf]
    %v2876 = vld [vmem:[#allocation8 + $0xd4] sm:$0xf]
    %v2877 = vld [vmem:[#allocation8 + $0xd8] sm:$0xf]
    %v2878 = vld [vmem:[#allocation8 + $0xdc] sm:$0xf]
    %v2879 = vld [vmem:[#allocation8 + $0xe0] sm:$0xf]
    %v2880 = vld [vmem:[#allocation8 + $0xe4] sm:$0xf]
    %v2881 = vld [vmem:[#allocation8 + $0xe8] sm:$0xf]
    %v2882 = vld [vmem:[#allocation8 + $0xec] sm:$0xf]
    %v2883 = vld [vmem:[#allocation8 + $0xf0] sm:$0xf]
    %v2884 = vld [vmem:[#allocation8 + $0xf4] sm:$0xf]
    %v2885 = vld [vmem:[#allocation8 + $0xf8] sm:$0xf]
    %v2886 = vld [vmem:[#allocation8 + $0xfc] sm:$0xf]
    %v2887 = vld [vmem:[%s6] sm:$0x1]
    %v2889 = vlaneseq
    %v2890 = vshrl.u32 %v2889, 7
    %v2891 = vsub.s32 0, %v2890
    %v2892 = vrot.slane %v2887, %v2891
    %v2958 = vunpack.c.l.b16 %v2823
    %v2959 = vunpack.c.l.b16 %v2824
    %v2960 = vunpack.c.l.b16 %v2825
    %v2961 = vunpack.c.l.b16 %v2826
    %v2962 = vunpack.c.l.b16 %v2827
    %v2963 = vunpack.c.l.b16 %v2828
    %v2964 = vunpack.c.l.b16 %v2829
    %v2965 = vunpack.c.l.b16 %v2830
    %v2966 = vunpack.c.l.b16 %v2831
    %v2967 = vunpack.c.l.b16 %v2832
    %v2968 = vunpack.c.l.b16 %v2833
    %v2969 = vunpack.c.l.b16 %v2834
    %v2970 = vunpack.c.l.b16 %v2835
    %v2971 = vunpack.c.l.b16 %v2836
    %v2972 = vunpack.c.l.b16 %v2837
    %v2973 = vunpack.c.l.b16 %v2838
    %v2974 = vunpack.c.l.b16 %v2839
    %v2975 = vunpack.c.l.b16 %v2840
    %v2976 = vunpack.c.l.b16 %v2841
    %v2977 = vunpack.c.l.b16 %v2842
    %v2978 = vunpack.c.l.b16 %v2843
    %v2979 = vunpack.c.l.b16 %v2844
    %v2980 = vunpack.c.l.b16 %v2845
    %v2981 = vunpack.c.l.b16 %v2846
    %v2982 = vunpack.c.l.b16 %v2847
    %v2983 = vunpack.c.l.b16 %v2848
    %v2984 = vunpack.c.l.b16 %v2849
    %v2985 = vunpack.c.l.b16 %v2850
    %v2986 = vunpack.c.l.b16 %v2851
    %v2987 = vunpack.c.l.b16 %v2852
    %v2988 = vunpack.c.l.b16 %v2853
    %v2989 = vunpack.c.l.b16 %v2854
    %v2990 = vunpack.c.l.b16 %v2855
    %v2991 = vunpack.c.l.b16 %v2856
    %v2992 = vunpack.c.l.b16 %v2857
    %v2993 = vunpack.c.l.b16 %v2858
    %v2994 = vunpack.c.l.b16 %v2859
    %v2995 = vunpack.c.l.b16 %v2860
    %v2996 = vunpack.c.l.b16 %v2861
    %v2997 = vunpack.c.l.b16 %v2862
    %v2998 = vunpack.c.l.b16 %v2863
    %v2999 = vunpack.c.l.b16 %v2864
    %v3000 = vunpack.c.l.b16 %v2865
    %v3001 = vunpack.c.l.b16 %v2866
    %v3002 = vunpack.c.l.b16 %v2867
    %v3003 = vunpack.c.l.b16 %v2868
    %v3004 = vunpack.c.l.b16 %v2869
    %v3005 = vunpack.c.l.b16 %v2870
    %v3006 = vunpack.c.l.b16 %v2871
    %v3007 = vunpack.c.l.b16 %v2872
    %v3008 = vunpack.c.l.b16 %v2873
    %v3009 = vunpack.c.l.b16 %v2874
    %v3010 = vunpack.c.l.b16 %v2875
    %v3011 = vunpack.c.l.b16 %v2876
    %v3012 = vunpack.c.l.b16 %v2877
    %v3013 = vunpack.c.l.b16 %v2878
    %v3014 = vunpack.c.l.b16 %v2879
    %v3015 = vunpack.c.l.b16 %v2880
    %v3016 = vunpack.c.l.b16 %v2881
    %v3017 = vunpack.c.l.b16 %v2882
    %v3018 = vunpack.c.l.b16 %v2883
    %v3019 = vunpack.c.l.b16 %v2884
    %v3020 = vunpack.c.l.b16 %v2885
    %v3021 = vunpack.c.l.b16 %v2886
    %v3022 = vpack.c.b16 %v2959, %v2958
    %v3023 = vpack.c.b16 %v2961, %v2960
    %v3024 = vpack.c.b16 %v2963, %v2962
    %v3025 = vpack.c.b16 %v2965, %v2964
    %v3026 = vpack.c.b16 %v2967, %v2966
    %v3027 = vpack.c.b16 %v2969, %v2968
    %v3028 = vpack.c.b16 %v2971, %v2970
    %v3029 = vpack.c.b16 %v2973, %v2972
    %v3030 = vpack.c.b16 %v2975, %v2974
    %v3031 = vpack.c.b16 %v2977, %v2976
    %v3032 = vpack.c.b16 %v2979, %v2978
    %v3033 = vpack.c.b16 %v2981, %v2980
    %v3034 = vpack.c.b16 %v2983, %v2982
    %v3035 = vpack.c.b16 %v2985, %v2984
    %v3036 = vpack.c.b16 %v2987, %v2986
    %v3037 = vpack.c.b16 %v2989, %v2988
    %v3038 = vpack.c.b16 %v2991, %v2990
    %v3039 = vpack.c.b16 %v2993, %v2992
    %v3040 = vpack.c.b16 %v2995, %v2994
    %v3041 = vpack.c.b16 %v2997, %v2996
    %v3042 = vpack.c.b16 %v2999, %v2998
    %v3043 = vpack.c.b16 %v3001, %v3000
    %v3044 = vpack.c.b16 %v3003, %v3002
    %v3045 = vpack.c.b16 %v3005, %v3004
    %v3046 = vpack.c.b16 %v3007, %v3006
    %v3047 = vpack.c.b16 %v3009, %v3008
    %v3048 = vpack.c.b16 %v3011, %v3010
    %v3049 = vpack.c.b16 %v3013, %v3012
    %v3050 = vpack.c.b16 %v3015, %v3014
    %v3051 = vpack.c.b16 %v3017, %v3016
    %v3052 = vpack.c.b16 %v3019, %v3018
    %v3053 = vpack.c.b16 %v3021, %v3020
    %3086 = vmatprep.subr.bf16.mxu0 0
    %3087 = vmatpush1.bf16.msra.mxu0 %v3022
    %3088 = vmatprep.subr.bf16.mxu0 0
    %3089 = vmatpush1.bf16.msra.mxu0 %v3023
    %3090 = vmatprep.subr.bf16.mxu0 0
    %3091 = vmatpush1.bf16.msra.mxu0 %v3024
    %3092 = vmatprep.subr.bf16.mxu0 0
    %3093 = vmatpush1.bf16.msra.mxu0 %v3025
    %3094 = vmatprep.subr.bf16.mxu0 0
    %3095 = vmatpush1.bf16.msra.mxu0 %v3026
    %3096 = vmatprep.subr.bf16.mxu0 0
    %3097 = vmatpush1.bf16.msra.mxu0 %v3027
    %3098 = vmatprep.subr.bf16.mxu0 0
    %3099 = vmatpush1.bf16.msra.mxu0 %v3028
    %3100 = vmatprep.subr.bf16.mxu0 0
    %3101 = vmatpush1.bf16.msra.mxu0 %v3029
    %3102 = vmatprep.subr.bf16.mxu0 0
    %3103 = vmatpush1.bf16.msra.mxu0 %v3030
    %3104 = vmatprep.subr.bf16.mxu0 0
    %3105 = vmatpush1.bf16.msra.mxu0 %v3031
    %3106 = vmatprep.subr.bf16.mxu0 0
    %3107 = vmatpush1.bf16.msra.mxu0 %v3032
    %3108 = vmatprep.subr.bf16.mxu0 0
    %3109 = vmatpush1.bf16.msra.mxu0 %v3033
    %3110 = vmatprep.subr.bf16.mxu0 0
    %3111 = vmatpush1.bf16.msra.mxu0 %v3034
    %3112 = vmatprep.subr.bf16.mxu0 0
    %3113 = vmatpush1.bf16.msra.mxu0 %v3035
    %3114 = vmatprep.subr.bf16.mxu0 0
    %3115 = vmatpush1.bf16.msra.mxu0 %v3036
    %3116 = vmatprep.subr.bf16.mxu0 0
    %3117 = vmatpush1.bf16.msra.mxu0 %v3037
    %3118 = vmatprep.mubr.bf16.mxu0 %v2820
    %3119 = vmatmul.mubr.bf16.gmra.mrb[0].mxu0 %v2819
    %v3120 = vpop.f32.mrb[0].mxu0
    %v3121 = vadd.f32 %v2892, %v3120
    %v3122 = vpop.f32.mrb[0].mxu0
    %v3123 = vpop.f32.mrb[0].mxu0
    %v3124 = vadd.f32 %v2892, %v3123
    %v3125 = vpop.f32.mrb[0].mxu0
    %3126 = vdwg.mxu0
    %3127 = vmatprep.subr.bf16.mxu0 0
    %3128 = vmatpush1.bf16.msra.mxu0 %v3038
    %3129 = vmatprep.subr.bf16.mxu0 0
    %3130 = vmatpush1.bf16.msra.mxu0 %v3039
    %3131 = vmatprep.subr.bf16.mxu0 0
    %3132 = vmatpush1.bf16.msra.mxu0 %v3040
    %3133 = vmatprep.subr.bf16.mxu0 0
    %3134 = vmatpush1.bf16.msra.mxu0 %v3041
    %3135 = vmatprep.subr.bf16.mxu0 0
    %3136 = vmatpush1.bf16.msra.mxu0 %v3042
    %3137 = vmatprep.subr.bf16.mxu0 0
    %3138 = vmatpush1.bf16.msra.mxu0 %v3043
    %3139 = vmatprep.subr.bf16.mxu0 0
    %3140 = vmatpush1.bf16.msra.mxu0 %v3044
    %3141 = vmatprep.subr.bf16.mxu0 0
    %3142 = vmatpush1.bf16.msra.mxu0 %v3045
    %3143 = vmatprep.subr.bf16.mxu0 0
    %3144 = vmatpush1.bf16.msra.mxu0 %v3046
    %3145 = vmatprep.subr.bf16.mxu0 0
    %3146 = vmatpush1.bf16.msra.mxu0 %v3047
    %3147 = vmatprep.subr.bf16.mxu0 0
    %3148 = vmatpush1.bf16.msra.mxu0 %v3048
    %3149 = vmatprep.subr.bf16.mxu0 0
    %3150 = vmatpush1.bf16.msra.mxu0 %v3049
    %3151 = vmatprep.subr.bf16.mxu0 0
    %3152 = vmatpush1.bf16.msra.mxu0 %v3050
    %3153 = vmatprep.subr.bf16.mxu0 0
    %3154 = vmatpush1.bf16.msra.mxu0 %v3051
    %3155 = vmatprep.subr.bf16.mxu0 0
    %3156 = vmatpush1.bf16.msra.mxu0 %v3052
    %3157 = vmatprep.subr.bf16.mxu0 0
    %3158 = vmatpush1.bf16.msra.mxu0 %v3053
    %3159 = vmatprep.mubr.bf16.mxu0 %v2822
    %3160 = vmatmul.mubr.bf16.gmra.mrb[0].mxu0 %v2821
    %v3161 = vpop.f32.mrb[0].mxu0
    %v3162 = vadd.f32 %v3121, %v3161
    %v3163 = vpop.f32.mrb[0].mxu0
    %v3164 = vpop.f32.mrb[0].mxu0
    %v3165 = vadd.f32 %v3124, %v3164
    %v3166 = vpop.f32.mrb[0].mxu0
    %3167 = vdwg.mxu0
    %v3168 = vmax.f32 %v3162, 0.0
    %v3169 = vmax.f32 %v3165, 0.0
    %3170 = vst [vmem:[#allocation10] sm:$0xff] %v3168
    %3171 = vst [vmem:[#allocation10 + $0x8] sm:$0xff] %v3169
    // Predicated region
    $region46: #{tpu_custom_call.1} parent=1 // pred_check
      _
    $region47: #{tpu_custom_call.1} parent=1 // pred_check_branch
      %3173 = sbr.rel (0) target = $region49
    $region48: #{tpu_custom_call.1} parent=1 // pred_region
      %s3175 = ssub.s32 256, 256
      %3176 = vsyncadd [#allocation4], %s3175
      %s3177 = sshll.u32 [#allocation10], 4
      %s3178 = int_to_ptr.vmem [resolvable:$true] %s3177
      %3183 = dma.vmem_to_hbm [thread:$0]  %s3178, 256, %s7, [#allocation4], 128, 128, 8
    $region49: #{tpu_custom_call.1} parent=1 // pred_fallthru
      _
    // Predicated region
    $region50: #{tpu_custom_call.1} parent=1 // pred_check
      _
    $region51: #{tpu_custom_call.1} parent=1 // pred_check_branch
      %3185 = sbr.rel (0) target = $region53
    $region52: #{tpu_custom_call.1} parent=1 // pred_region
      %3186 = dma.done [#allocation4], 256
    $region53: #{tpu_custom_call.1} parent=1 // pred_fallthru
      _
    %3187 = vsyncpa [#allocation3], 1
    %3188 = vsyncpa [#allocation6], 1
    %3189 = vsyncpa [#allocation9], 1
    %3190 = vsyncpa [#allocation4], 1

</llo_original>
